<compile_context>
chip_gen: v5e
topology: v5e:2x2
jax: 0.10.0
libtpu: 0.0.40
codegen_flags: <defaults>
</compile_context>

<pallas_src>
import functools

import jax
import jax.numpy as jnp
from jax.experimental import pallas as pl
from jax.experimental.pallas import tpu as pltpu


# ----------------------------- Pallas kernel ---------------------------------
def _gated_conv_kernel(x_ref, w_ref, b_ref, o_ref, *,
                       KH, KW, OH, OW, stride, dilation, C_out, activation):
    """One batch-tile of the gated conv.

    x_ref : (bt, Hp, Wp, C_in)   spatially padded NHWC input tile (bf16)
    w_ref : (K, 2*C_out)         fused [Wh | Wg] weights, K = KH*KW*C_in (bf16)
    b_ref : (1, 2*C_out)         fused [bh | bg] bias (f32)
    o_ref : (bt*OH*OW, C_out)    gated output rows, (b, oh, ow) row-major (f32)
    """
    bt = x_ref.shape[0]
    x = x_ref[...]                                   # (bt, Hp, Wp, C_in)

    # ---- im2col in VMEM: KH*KW shifted slices concatenated along the channel axis ----
    taps = []
    for kh in range(KH):
        for kw in range(KW):
            h0 = kh * dilation
            w0 = kw * dilation
            taps.append(x[:, h0:h0 + (OH - 1) * stride + 1:stride,
                            w0:w0 + (OW - 1) * stride + 1:stride, :])
    patches = taps[0] if len(taps) == 1 else jnp.concatenate(taps, axis=-1)
    K = patches.shape[-1]
    patches = patches.reshape(bt * OH * OW, K)       # (rows, K), minor dim unchanged

    # ---- single fused GEMM (bf16 in, f32 accumulate) + bias -------------------------
    acc = jnp.dot(patches, w_ref[...], preferred_element_type=jnp.float32)
    acc = acc + b_ref[...]                           # broadcast (1, 2*C_out)

    # ---- split, activate, gate (all f32) -------------------------------------------
    h = acc[:, :C_out]
    g = acc[:, C_out:]
    if activation is not None:
        h = activation(h)
    g = pl.reciprocal(1.0 + jnp.exp(-g), approx=True)   # sigmoid: EUP exp + EUP recip
    o_ref[...] = (h * g).astype(o_ref.dtype)


# ------------------------------ host wrapper ----------------------------------
def gated_conv2d(x, wh, bh, wg, bg, *, stride=1, padding=0, dilation=1,
                 activation=None, batch_tile=8, compute_dtype=jnp.bfloat16):
    """GatedConv2d forward.  x: (N, C_in, H, W) NCHW.  Returns (N, C_out, OH, OW)."""
    N, C_in, H, W = x.shape
    C_out, C_in_w, KH, KW = wh.shape
    assert C_in_w == C_in

    OH = (H + 2 * padding - dilation * (KH - 1) - 1) // stride + 1
    OW = (W + 2 * padding - dilation * (KW - 1) - 1) // stride + 1
    Hp = H + 2 * padding
    Wp = W + 2 * padding
    K = KH * KW * C_in
    C2 = 2 * C_out

    # batch tile: clamp to N; keep the M tile (bt*OH*OW rows) a multiple of 8 when
    # possible (otherwise bt == N and the block spans the full M axis, which is fine).
    bt = max(1, min(batch_tile, N))
    while (bt * OH * OW) % 8 != 0 and bt < N:
        bt += 1
    N_pad = pl.cdiv(N, bt) * bt
    M_tile = bt * OH * OW

    # ---- input: NCHW -> zero-padded NHWC, bf16 (one pass; no KH*KW blow-up in HBM) ----
    xp = jnp.transpose(x, (0, 2, 3, 1))
    xp = jnp.pad(xp, ((0, N_pad - N), (padding, padding), (padding, padding), (0, 0)))
    xp = xp.astype(compute_dtype)

    # ---- fused weights/bias: K ordering (kh, kw, c_in); columns = [h | g] ------------
    def prep_w(w):  # (C_out, C_in, KH, KW) -> (K, C_out) with row = (kh*KW + kw)*C_in + ci
        return jnp.transpose(w, (2, 3, 1, 0)).reshape(K, C_out)

    w2 = jnp.concatenate([prep_w(wh), prep_w(wg)], axis=1).astype(compute_dtype)  # (K, 2*C_out)
    b2 = jnp.concatenate([bh, bg]).reshape(1, C2).astype(jnp.float32)

    grid = (N_pad // bt,)
    kernel = functools.partial(
        _gated_conv_kernel, KH=KH, KW=KW, OH=OH, OW=OW,
        stride=stride, dilation=dilation, C_out=C_out, activation=activation)

    out_flat = pl.pallas_call(
        kernel,
        out_shape=jax.ShapeDtypeStruct((N_pad * OH * OW, C_out), jnp.float32),
        grid_spec=pltpu.PrefetchScalarGridSpec(
            num_scalar_prefetch=0,
            grid=grid,
            in_specs=[
                pl.BlockSpec((bt, Hp, Wp, C_in), lambda i: (i, 0, 0, 0)),  # raw input tile
                pl.BlockSpec((K, C2), lambda i: (0, 0)),                   # fused W (resident)
                pl.BlockSpec((1, C2), lambda i: (0, 0)),                   # fused bias
            ],
            out_specs=pl.BlockSpec((M_tile, C_out), lambda i: (i, 0)),
        ),
        compiler_params=pltpu.CompilerParams(
            dimension_semantics=("parallel",),   # batch axis -> shardable across TCs (v7x)
            # vmem_limit_bytes=...: defaults are ample here; raise for very large
            # C_in/C_out x batch_tile combinations (v7x has 64 MiB physical VMEM).
        ),
    )(xp, w2, b2)

    out = out_flat[:N * OH * OW].reshape(N, OH, OW, C_out).transpose(0, 3, 1, 2)  # NCHW
    return out


# ------------------------------ reference -------------------------------------
def gated_conv2d_ref(x, wh, bh, wg, bg, *, stride=1, padding=0, dilation=1, activation=None):
    dn = jax.lax.conv_dimension_numbers(x.shape, wh.shape, ("NCHW", "OIHW", "NCHW"))
    conv = lambda w, b: jax.lax.conv_general_dilated(
        x, w, window_strides=(stride, stride),
        padding=[(padding, padding), (padding, padding)],
        rhs_dilation=(dilation, dilation), dimension_numbers=dn,
    ) + b.reshape(1, -1, 1, 1)
    h = conv(wh, bh)
    if activation is not None:
        h = activation(h)
    g = jax.nn.sigmoid(conv(wg, bg))
    return h * g


# -------------------------------- main -----------------------------------------
if __name__ == "__main__":
    key = jax.random.PRNGKey(0)
    k_x, k_wh, k_bh, k_wg, k_bg = jax.random.split(key, 5)

    # module config: GatedConv2d(input_channels=4, output_channels=8,
    #                            kernel_size=3, stride=1, padding=1, dilation=1,
    #                            activation=None)
    N, C_in, H, W = 2, 4, 16, 16
    C_out, KH, KW = 8, 3, 3
    stride, padding, dilation = 1, 1, 1

    x = jax.random.normal(k_x, (N, C_in, H, W), dtype=jnp.float32)
    fan_in = C_in * KH * KW
    scale = 1.0 / jnp.sqrt(fan_in)
    wh = jax.random.uniform(k_wh, (C_out, C_in, KH, KW), jnp.float32, -scale, scale)
    bh = jax.random.uniform(k_bh, (C_out,), jnp.float32, -scale, scale)
    wg = jax.random.uniform(k_wg, (C_out, C_in, KH, KW), jnp.float32, -scale, scale)
    bg = jax.random.uniform(k_bg, (C_out,), jnp.float32, -scale, scale)

    out = gated_conv2d(x, wh, bh, wg, bg,
                       stride=stride, padding=padding, dilation=dilation,
                       activation=None)
    out = jax.block_until_ready(out)

    ref = jax.block_until_ready(
        gated_conv2d_ref(x, wh, bh, wg, bg,
                         stride=stride, padding=padding, dilation=dilation,
                         activation=None))

    assert out.shape == (N, C_out, H, W), out.shape
    # bf16 input/weight streams (f32 accumulate) vs a full-f32 XLA reference.
    assert jnp.allclose(out, ref, atol=5e-2, rtol=5e-2), "mismatch vs reference"
    print("KERNEL_OK")
</pallas_src>

<mosaic_0001>
module attributes {stable_mosaic.version = 11 : i64} {
  func.func @_gated_conv_kernel(%arg0: i32, %arg1: memref<2x18x18x4xbf16, #tpu.memory_space<vmem>>, %arg2: memref<36x16xbf16, #tpu.memory_space<vmem>>, %arg3: memref<1x16xf32, #tpu.memory_space<vmem>>, %arg4: memref<512x8xf32, #tpu.memory_space<vmem>>) attributes {dimension_semantics = [#tpu.dimension_semantics<parallel>], iteration_bounds = array<i64: 1>, scalar_prefetch = 0 : i64, scratch_operands = 0 : i64, tpu.core_type = #tpu.core_type<tc>, window_params = [{transform_indices = @transform_0, window_bounds = array<i64: 2, 18, 18, 4>}, {pipeline_mode = #tpu.pipeline_mode<synchronous>, transform_indices = @transform_1, window_bounds = array<i64: 36, 16>}, {pipeline_mode = #tpu.pipeline_mode<synchronous>, transform_indices = @transform_2, window_bounds = array<i64: 1, 16>}, {transform_indices = @transform_3, window_bounds = array<i64: 512, 8>}]} {
    %c0 = arith.constant 0 : index
    %c0_0 = arith.constant 0 : index
    %c0_1 = arith.constant 0 : index
    %c0_2 = arith.constant 0 : index
    %0 = vector.load %arg1[%c0, %c0_0, %c0_1, %c0_2] : memref<2x18x18x4xbf16, #tpu.memory_space<vmem>>, vector<2x18x18x4xbf16>
    %1 = vector.extract_strided_slice %0 {offsets = [0, 0, 0, 0], sizes = [2, 16, 16, 4], strides = [1, 1, 1, 1]} : vector<2x18x18x4xbf16> to vector<2x16x16x4xbf16>
    %2 = vector.extract_strided_slice %0 {offsets = [0, 0, 1, 0], sizes = [2, 16, 16, 4], strides = [1, 1, 1, 1]} : vector<2x18x18x4xbf16> to vector<2x16x16x4xbf16>
    %3 = vector.extract_strided_slice %0 {offsets = [0, 0, 2, 0], sizes = [2, 16, 16, 4], strides = [1, 1, 1, 1]} : vector<2x18x18x4xbf16> to vector<2x16x16x4xbf16>
    %4 = vector.extract_strided_slice %0 {offsets = [0, 1, 0, 0], sizes = [2, 16, 16, 4], strides = [1, 1, 1, 1]} : vector<2x18x18x4xbf16> to vector<2x16x16x4xbf16>
    %5 = vector.extract_strided_slice %0 {offsets = [0, 1, 1, 0], sizes = [2, 16, 16, 4], strides = [1, 1, 1, 1]} : vector<2x18x18x4xbf16> to vector<2x16x16x4xbf16>
    %6 = vector.extract_strided_slice %0 {offsets = [0, 1, 2, 0], sizes = [2, 16, 16, 4], strides = [1, 1, 1, 1]} : vector<2x18x18x4xbf16> to vector<2x16x16x4xbf16>
    %7 = vector.extract_strided_slice %0 {offsets = [0, 2, 0, 0], sizes = [2, 16, 16, 4], strides = [1, 1, 1, 1]} : vector<2x18x18x4xbf16> to vector<2x16x16x4xbf16>
    %8 = vector.extract_strided_slice %0 {offsets = [0, 2, 1, 0], sizes = [2, 16, 16, 4], strides = [1, 1, 1, 1]} : vector<2x18x18x4xbf16> to vector<2x16x16x4xbf16>
    %9 = vector.extract_strided_slice %0 {offsets = [0, 2, 2, 0], sizes = [2, 16, 16, 4], strides = [1, 1, 1, 1]} : vector<2x18x18x4xbf16> to vector<2x16x16x4xbf16>
    %10 = tpu.concatenate %1, %2, %3, %4, %5, %6, %7, %8, %9 in 3 : vector<2x16x16x4xbf16>, vector<2x16x16x4xbf16>, vector<2x16x16x4xbf16>, vector<2x16x16x4xbf16>, vector<2x16x16x4xbf16>, vector<2x16x16x4xbf16>, vector<2x16x16x4xbf16>, vector<2x16x16x4xbf16>, vector<2x16x16x4xbf16> -> vector<2x16x16x36xbf16>
    %11 = vector.shape_cast %10 : vector<2x16x16x36xbf16> to vector<512x36xbf16>
    %c0_3 = arith.constant 0 : index
    %c0_4 = arith.constant 0 : index
    %12 = vector.load %arg2[%c0_3, %c0_4] : memref<36x16xbf16, #tpu.memory_space<vmem>>, vector<36x16xbf16>
    %cst = arith.constant dense<0.000000e+00> : vector<512x16xf32>
    %13 = tpu.matmul %11, %12, %cst {dimension_numbers = #tpu.dot_dimension_numbers<[1], [0], [0], [1], [0, 0, 1, 1], [], []>} : vector<512x36xbf16>, vector<36x16xbf16>, vector<512x16xf32> -> vector<512x16xf32>
    %c0_5 = arith.constant 0 : index
    %c0_6 = arith.constant 0 : index
    %14 = vector.load %arg3[%c0_5, %c0_6] : memref<1x16xf32, #tpu.memory_space<vmem>>, vector<1x16xf32>
    %15 = vector.broadcast %14 : vector<1x16xf32> to vector<512x16xf32>
    %16 = arith.addf %13, %15 : vector<512x16xf32>
    %17 = vector.extract_strided_slice %16 {offsets = [0, 0], sizes = [512, 8], strides = [1, 1]} : vector<512x16xf32> to vector<512x8xf32>
    %18 = vector.extract_strided_slice %16 {offsets = [0, 8], sizes = [512, 8], strides = [1, 1]} : vector<512x16xf32> to vector<512x8xf32>
    %cst_7 = arith.constant 0.000000e+00 : f32
    %19 = vector.broadcast %cst_7 : f32 to vector<512x8xf32>
    %20 = arith.subf %19, %18 : vector<512x8xf32>
    %21 = math.exp %20 : vector<512x8xf32>
    %cst_8 = arith.constant 1.000000e+00 : f32
    %22 = vector.broadcast %cst_8 : f32 to vector<512x8xf32>
    %23 = arith.addf %22, %21 : vector<512x8xf32>
    %24 = tpu.reciprocal %23 {approx = true} : vector<512x8xf32> -> vector<512x8xf32>
    %25 = arith.mulf %17, %24 : vector<512x8xf32>
    %c0_9 = arith.constant 0 : index
    %c0_10 = arith.constant 0 : index
    %26 = vector.load %arg4[%c0_9, %c0_10] : memref<512x8xf32, #tpu.memory_space<vmem>>, vector<512x8xf32>
    tpu.vector_store %arg4[%c0_9, %c0_10], %25 {strides = array<i32>} : memref<512x8xf32, #tpu.memory_space<vmem>>, vector<512x8xf32>,
    return
  }
  func.func @transform_0(%arg0: i32) -> (i32, i32, i32, i32) {
    %c0_i32 = arith.constant 0 : i32
    %c0_i32_0 = arith.constant 0 : i32
    %c0_i32_1 = arith.constant 0 : i32
    %c0_i32_2 = arith.constant 0 : i32
    return %arg0, %c0_i32, %c0_i32_0, %c0_i32_1 : i32, i32, i32, i32
  }
  func.func @transform_1(%arg0: i32) -> (i32, i32) {
    %c0_i32 = arith.constant 0 : i32
    %c0_i32_0 = arith.constant 0 : i32
    %c0_i32_1 = arith.constant 0 : i32
    return %c0_i32, %c0_i32_0 : i32, i32
  }
  func.func @transform_2(%arg0: i32) -> (i32, i32) {
    %c0_i32 = arith.constant 0 : i32
    %c0_i32_0 = arith.constant 0 : i32
    %c0_i32_1 = arith.constant 0 : i32
    return %c0_i32, %c0_i32_0 : i32, i32
  }
  func.func @transform_3(%arg0: i32) -> (i32, i32) {
    %c0_i32 = arith.constant 0 : i32
    %c0_i32_0 = arith.constant 0 : i32
    return %arg0, %c0_i32 : i32, i32
  }
}

</mosaic_0001>

<llo_original>
// kernel: tpu_custom_call.1
$region0: #{tpu_custom_call.1}
  #allocation0 [shape = 'u32[]', space=smem, size = 0x4, offset = 0x4, fixed_abs, tag = 'smem constant byte address 0x4 - core index']
  #allocation1 [shape = 'u32[72,128]{1,0:T(1,128)}', space=vmem, size = 0x9000, scoped, tag = 'internal scratch']
  %s0 = inlined_call_operand.vmem [shape: bf16[2,18,18,4], index: 0, kind: input, shape index: {}]
  %s1 = inlined_call_operand.vmem [shape: bf16[36,16], index: 1, kind: input, shape index: {}]
  %s2 = inlined_call_operand.vmem [shape: f32[1,16], index: 2, kind: input, shape index: {}]
  %s3 = inlined_call_operand.vmem [shape: f32[512,8], index: 3, kind: output, shape index: {}]
  %s4 = sld [smem:[#allocation0]]
  $region22: #{tpu_custom_call.1} parent=0
    _
  %s6 = ssub.s32 1, %s4
  %s7 = scalar_select 0, %s6, %s4
  // Predicated region
  $region2: #{tpu_custom_call.1} parent=0 // pred_check
    _
  $region3: #{tpu_custom_call.1} parent=0 // pred_check_branch
    %9 = sbr.rel (0) target = $region5
  $region4: #{tpu_custom_call.1} parent=0 // pred_region
    _
  $region5: #{tpu_custom_call.1} parent=0 // pred_fallthru
    _
  // Predicated region
  $region6: #{tpu_custom_call.1} parent=0 // pred_check
    _
  $region7: #{tpu_custom_call.1} parent=0 // pred_check_branch
    %11 = sbr.rel (0) target = $region9
  $region8: #{tpu_custom_call.1} parent=0 // pred_region
    _
  $region9: #{tpu_custom_call.1} parent=0 // pred_fallthru
    _
  // Predicated region
  $region10: #{tpu_custom_call.1} parent=0 // pred_check
    _
  $region11: #{tpu_custom_call.1} parent=0 // pred_check_branch
    %13 = sbr.rel (0) target = $region13
  $region12: #{tpu_custom_call.1} parent=0 // pred_region
    _
  $region13: #{tpu_custom_call.1} parent=0 // pred_fallthru
    _
  %v15 = vld [vmem:[%s0] sm:$0xf]
  %v16 = vld [vmem:[%s0 + $0x4] sm:$0xf]
  %v17 = vld [vmem:[%s0 + $0x8] sm:$0x1]
  %v18 = vld [vmem:[%s0 + $0xc] sm:$0xf]
  %v19 = vld [vmem:[%s0 + $0x10] sm:$0xf]
  %v20 = vld [vmem:[%s0 + $0x14] sm:$0x1]
  %v21 = vld [vmem:[%s0 + $0x18] sm:$0xf]
  %v22 = vld [vmem:[%s0 + $0x1c] sm:$0xf]
  %v23 = vld [vmem:[%s0 + $0x20] sm:$0x1]
  %v24 = vld [vmem:[%s0 + $0x24] sm:$0xf]
  %v25 = vld [vmem:[%s0 + $0x28] sm:$0xf]
  %v26 = vld [vmem:[%s0 + $0x2c] sm:$0x1]
  %v27 = vld [vmem:[%s0 + $0x30] sm:$0xf]
  %v28 = vld [vmem:[%s0 + $0x34] sm:$0xf]
  %v29 = vld [vmem:[%s0 + $0x38] sm:$0x1]
  %v30 = vld [vmem:[%s0 + $0x3c] sm:$0xf]
  %v31 = vld [vmem:[%s0 + $0x40] sm:$0xf]
  %v32 = vld [vmem:[%s0 + $0x44] sm:$0x1]
  %v33 = vld [vmem:[%s0 + $0x48] sm:$0xf]
  %v34 = vld [vmem:[%s0 + $0x4c] sm:$0xf]
  %v35 = vld [vmem:[%s0 + $0x50] sm:$0x1]
  %v36 = vld [vmem:[%s0 + $0x54] sm:$0xf]
  %v37 = vld [vmem:[%s0 + $0x58] sm:$0xf]
  %v38 = vld [vmem:[%s0 + $0x5c] sm:$0x1]
  %v39 = vld [vmem:[%s0 + $0x60] sm:$0xf]
  %v40 = vld [vmem:[%s0 + $0x64] sm:$0xf]
  %v41 = vld [vmem:[%s0 + $0x68] sm:$0x1]
  %v42 = vld [vmem:[%s0 + $0x6c] sm:$0xf]
  %v43 = vld [vmem:[%s0 + $0x70] sm:$0xf]
  %v44 = vld [vmem:[%s0 + $0x74] sm:$0x1]
  %v45 = vld [vmem:[%s0 + $0x78] sm:$0xf]
  %v46 = vld [vmem:[%s0 + $0x7c] sm:$0xf]
  %v47 = vld [vmem:[%s0 + $0x80] sm:$0x1]
  %v48 = vld [vmem:[%s0 + $0x84] sm:$0xf]
  %v49 = vld [vmem:[%s0 + $0x88] sm:$0xf]
  %v50 = vld [vmem:[%s0 + $0x8c] sm:$0x1]
  %v51 = vld [vmem:[%s0 + $0x90] sm:$0xf]
  %v52 = vld [vmem:[%s0 + $0x94] sm:$0xf]
  %v53 = vld [vmem:[%s0 + $0x98] sm:$0x1]
  %v54 = vld [vmem:[%s0 + $0x9c] sm:$0xf]
  %v55 = vld [vmem:[%s0 + $0xa0] sm:$0xf]
  %v56 = vld [vmem:[%s0 + $0xa4] sm:$0x1]
  %v57 = vld [vmem:[%s0 + $0xa8] sm:$0xf]
  %v58 = vld [vmem:[%s0 + $0xac] sm:$0xf]
  %v59 = vld [vmem:[%s0 + $0xb0] sm:$0x1]
  %v60 = vld [vmem:[%s0 + $0xb4] sm:$0xf]
  %v61 = vld [vmem:[%s0 + $0xb8] sm:$0xf]
  %v62 = vld [vmem:[%s0 + $0xbc] sm:$0x1]
  %v63 = vld [vmem:[%s0 + $0xc0] sm:$0xf]
  %v64 = vld [vmem:[%s0 + $0xc4] sm:$0xf]
  %v65 = vld [vmem:[%s0 + $0xc8] sm:$0x1]
  %v66 = vld [vmem:[%s0 + $0xcc] sm:$0xf]
  %v67 = vld [vmem:[%s0 + $0xd0] sm:$0xf]
  %v68 = vld [vmem:[%s0 + $0xd4] sm:$0x1]
  %v69 = vld [vmem:[%s0 + $0xd8] sm:$0xf]
  %v70 = vld [vmem:[%s0 + $0xdc] sm:$0xf]
  %v71 = vld [vmem:[%s0 + $0xe0] sm:$0x1]
  %v72 = vld [vmem:[%s0 + $0xe4] sm:$0xf]
  %v73 = vld [vmem:[%s0 + $0xe8] sm:$0xf]
  %v74 = vld [vmem:[%s0 + $0xec] sm:$0x1]
  %v75 = vld [vmem:[%s0 + $0xf0] sm:$0xf]
  %v76 = vld [vmem:[%s0 + $0xf4] sm:$0xf]
  %v77 = vld [vmem:[%s0 + $0xf8] sm:$0x1]
  %v78 = vld [vmem:[%s0 + $0xfc] sm:$0xf]
  %v79 = vld [vmem:[%s0 + $0x100] sm:$0xf]
  %v80 = vld [vmem:[%s0 + $0x104] sm:$0x1]
  %v81 = vld [vmem:[%s0 + $0x108] sm:$0xf]
  %v82 = vld [vmem:[%s0 + $0x10c] sm:$0xf]
  %v83 = vld [vmem:[%s0 + $0x110] sm:$0x1]
  %v84 = vld [vmem:[%s0 + $0x114] sm:$0xf]
  %v85 = vld [vmem:[%s0 + $0x118] sm:$0xf]
  %v86 = vld [vmem:[%s0 + $0x11c] sm:$0x1]
  %v87 = vld [vmem:[%s0 + $0x120] sm:$0xf]
  %v88 = vld [vmem:[%s0 + $0x124] sm:$0xf]
  %v89 = vld [vmem:[%s0 + $0x128] sm:$0x1]
  %v90 = vld [vmem:[%s0 + $0x12c] sm:$0xf]
  %v91 = vld [vmem:[%s0 + $0x130] sm:$0xf]
  %v92 = vld [vmem:[%s0 + $0x134] sm:$0x1]
  %v93 = vld [vmem:[%s0 + $0x138] sm:$0xf]
  %v94 = vld [vmem:[%s0 + $0x13c] sm:$0xf]
  %v95 = vld [vmem:[%s0 + $0x140] sm:$0x1]
  %v96 = vld [vmem:[%s0 + $0x144] sm:$0xf]
  %v97 = vld [vmem:[%s0 + $0x148] sm:$0xf]
  %v98 = vld [vmem:[%s0 + $0x14c] sm:$0x1]
  %v99 = vld [vmem:[%s0 + $0x150] sm:$0xf]
  %v100 = vld [vmem:[%s0 + $0x154] sm:$0xf]
  %v101 = vld [vmem:[%s0 + $0x158] sm:$0x1]
  %v102 = vld [vmem:[%s0 + $0x15c] sm:$0xf]
  %v103 = vld [vmem:[%s0 + $0x160] sm:$0xf]
  %v104 = vld [vmem:[%s0 + $0x164] sm:$0x1]
  %v105 = vld [vmem:[%s0 + $0x168] sm:$0xf]
  %v106 = vld [vmem:[%s0 + $0x16c] sm:$0xf]
  %v107 = vld [vmem:[%s0 + $0x170] sm:$0x1]
  %v108 = vld [vmem:[%s0 + $0x174] sm:$0xf]
  %v109 = vld [vmem:[%s0 + $0x178] sm:$0xf]
  %v110 = vld [vmem:[%s0 + $0x17c] sm:$0x1]
  %v111 = vld [vmem:[%s0 + $0x180] sm:$0xf]
  %v112 = vld [vmem:[%s0 + $0x184] sm:$0xf]
  %v113 = vld [vmem:[%s0 + $0x188] sm:$0x1]
  %v114 = vld [vmem:[%s0 + $0x18c] sm:$0xf]
  %v115 = vld [vmem:[%s0 + $0x190] sm:$0xf]
  %v116 = vld [vmem:[%s0 + $0x194] sm:$0x1]
  %v117 = vld [vmem:[%s0 + $0x198] sm:$0xf]
  %v118 = vld [vmem:[%s0 + $0x19c] sm:$0xf]
  %v119 = vld [vmem:[%s0 + $0x1a0] sm:$0x1]
  %v120 = vld [vmem:[%s0 + $0x1a4] sm:$0xf]
  %v121 = vld [vmem:[%s0 + $0x1a8] sm:$0xf]
  %v122 = vld [vmem:[%s0 + $0x1ac] sm:$0x1]
  %v187 = vunpack.c.l.b16 %v15
  %v188 = vunpack.c.l.b16 %v16
  %v189 = vunpack.c.l.b16 %v18
  %v190 = vunpack.c.l.b16 %v19
  %v191 = vunpack.c.l.b16 %v21
  %v192 = vunpack.c.l.b16 %v22
  %v193 = vunpack.c.l.b16 %v24
  %v194 = vunpack.c.l.b16 %v25
  %v195 = vunpack.c.l.b16 %v27
  %v196 = vunpack.c.l.b16 %v28
  %v197 = vunpack.c.l.b16 %v30
  %v198 = vunpack.c.l.b16 %v31
  %v199 = vunpack.c.l.b16 %v33
  %v200 = vunpack.c.l.b16 %v34
  %v201 = vunpack.c.l.b16 %v36
  %v202 = vunpack.c.l.b16 %v37
  %v203 = vunpack.c.l.b16 %v39
  %v204 = vunpack.c.l.b16 %v40
  %v205 = vunpack.c.l.b16 %v42
  %v206 = vunpack.c.l.b16 %v43
  %v207 = vunpack.c.l.b16 %v45
  %v208 = vunpack.c.l.b16 %v46
  %v209 = vunpack.c.l.b16 %v48
  %v210 = vunpack.c.l.b16 %v49
  %v211 = vunpack.c.l.b16 %v51
  %v212 = vunpack.c.l.b16 %v52
  %v213 = vunpack.c.l.b16 %v54
  %v214 = vunpack.c.l.b16 %v55
  %v215 = vunpack.c.l.b16 %v57
  %v216 = vunpack.c.l.b16 %v58
  %v217 = vunpack.c.l.b16 %v60
  %v218 = vunpack.c.l.b16 %v61
  %v219 = vunpack.c.l.b16 %v69
  %v220 = vunpack.c.l.b16 %v70
  %v221 = vunpack.c.l.b16 %v72
  %v222 = vunpack.c.l.b16 %v73
  %v223 = vunpack.c.l.b16 %v75
  %v224 = vunpack.c.l.b16 %v76
  %v225 = vunpack.c.l.b16 %v78
  %v226 = vunpack.c.l.b16 %v79
  %v227 = vunpack.c.l.b16 %v81
  %v228 = vunpack.c.l.b16 %v82
  %v229 = vunpack.c.l.b16 %v84
  %v230 = vunpack.c.l.b16 %v85
  %v231 = vunpack.c.l.b16 %v87
  %v232 = vunpack.c.l.b16 %v88
  %v233 = vunpack.c.l.b16 %v90
  %v234 = vunpack.c.l.b16 %v91
  %v235 = vunpack.c.l.b16 %v93
  %v236 = vunpack.c.l.b16 %v94
  %v237 = vunpack.c.l.b16 %v96
  %v238 = vunpack.c.l.b16 %v97
  %v239 = vunpack.c.l.b16 %v99
  %v240 = vunpack.c.l.b16 %v100
  %v241 = vunpack.c.l.b16 %v102
  %v242 = vunpack.c.l.b16 %v103
  %v243 = vunpack.c.l.b16 %v105
  %v244 = vunpack.c.l.b16 %v106
  %v245 = vunpack.c.l.b16 %v108
  %v246 = vunpack.c.l.b16 %v109
  %v247 = vunpack.c.l.b16 %v111
  %v248 = vunpack.c.l.b16 %v112
  %v249 = vunpack.c.l.b16 %v114
  %v250 = vunpack.c.l.b16 %v115
  %v251 = vpack.c.b16 %v188, %v187
  %v252 = vpack.c.b16 %v190, %v189
  %v253 = vpack.c.b16 %v192, %v191
  %v254 = vpack.c.b16 %v194, %v193
  %v255 = vpack.c.b16 %v196, %v195
  %v256 = vpack.c.b16 %v198, %v197
  %v257 = vpack.c.b16 %v200, %v199
  %v258 = vpack.c.b16 %v202, %v201
  %v259 = vpack.c.b16 %v204, %v203
  %v260 = vpack.c.b16 %v206, %v205
  %v261 = vpack.c.b16 %v208, %v207
  %v262 = vpack.c.b16 %v210, %v209
  %v263 = vpack.c.b16 %v212, %v211
  %v264 = vpack.c.b16 %v214, %v213
  %v265 = vpack.c.b16 %v216, %v215
  %v266 = vpack.c.b16 %v218, %v217
  %v267 = vpack.c.b16 %v220, %v219
  %v268 = vpack.c.b16 %v222, %v221
  %v269 = vpack.c.b16 %v224, %v223
  %v270 = vpack.c.b16 %v226, %v225
  %v271 = vpack.c.b16 %v228, %v227
  %v272 = vpack.c.b16 %v230, %v229
  %v273 = vpack.c.b16 %v232, %v231
  %v274 = vpack.c.b16 %v234, %v233
  %v275 = vpack.c.b16 %v236, %v235
  %v276 = vpack.c.b16 %v238, %v237
  %v277 = vpack.c.b16 %v240, %v239
  %v278 = vpack.c.b16 %v242, %v241
  %v279 = vpack.c.b16 %v244, %v243
  %v280 = vpack.c.b16 %v246, %v245
  %v281 = vpack.c.b16 %v248, %v247
  %v282 = vpack.c.b16 %v250, %v249
  %v315 = vunpack.c.l.b16 %v17
  %v316 = vunpack.c.l.b16 %v20
  %v317 = vunpack.c.l.b16 %v23
  %v318 = vunpack.c.l.b16 %v26
  %v319 = vunpack.c.l.b16 %v29
  %v320 = vunpack.c.l.b16 %v32
  %v321 = vunpack.c.l.b16 %v35
  %v322 = vunpack.c.l.b16 %v38
  %v323 = vunpack.c.l.b16 %v41
  %v324 = vunpack.c.l.b16 %v44
  %v325 = vunpack.c.l.b16 %v47
  %v326 = vunpack.c.l.b16 %v50
  %v327 = vunpack.c.l.b16 %v53
  %v328 = vunpack.c.l.b16 %v56
  %v329 = vunpack.c.l.b16 %v59
  %v330 = vunpack.c.l.b16 %v62
  %v331 = vunpack.c.l.b16 %v71
  %v332 = vunpack.c.l.b16 %v74
  %v333 = vunpack.c.l.b16 %v77
  %v334 = vunpack.c.l.b16 %v80
  %v335 = vunpack.c.l.b16 %v83
  %v336 = vunpack.c.l.b16 %v86
  %v337 = vunpack.c.l.b16 %v89
  %v338 = vunpack.c.l.b16 %v92
  %v339 = vunpack.c.l.b16 %v95
  %v340 = vunpack.c.l.b16 %v98
  %v341 = vunpack.c.l.b16 %v101
  %v342 = vunpack.c.l.b16 %v104
  %v343 = vunpack.c.l.b16 %v107
  %v344 = vunpack.c.l.b16 %v110
  %v345 = vunpack.c.l.b16 %v113
  %v346 = vunpack.c.l.b16 %v116
  %v347 = vpack.c.b16 %v315, %v315
  %v348 = vpack.c.b16 %v316, %v316
  %v349 = vpack.c.b16 %v317, %v317
  %v350 = vpack.c.b16 %v318, %v318
  %v351 = vpack.c.b16 %v319, %v319
  %v352 = vpack.c.b16 %v320, %v320
  %v353 = vpack.c.b16 %v321, %v321
  %v354 = vpack.c.b16 %v322, %v322
  %v355 = vpack.c.b16 %v323, %v323
  %v356 = vpack.c.b16 %v324, %v324
  %v357 = vpack.c.b16 %v325, %v325
  %v358 = vpack.c.b16 %v326, %v326
  %v359 = vpack.c.b16 %v327, %v327
  %v360 = vpack.c.b16 %v328, %v328
  %v361 = vpack.c.b16 %v329, %v329
  %v362 = vpack.c.b16 %v330, %v330
  %v363 = vpack.c.b16 %v331, %v331
  %v364 = vpack.c.b16 %v332, %v332
  %v365 = vpack.c.b16 %v333, %v333
  %v366 = vpack.c.b16 %v334, %v334
  %v367 = vpack.c.b16 %v335, %v335
  %v368 = vpack.c.b16 %v336, %v336
  %v369 = vpack.c.b16 %v337, %v337
  %v370 = vpack.c.b16 %v338, %v338
  %v371 = vpack.c.b16 %v339, %v339
  %v372 = vpack.c.b16 %v340, %v340
  %v373 = vpack.c.b16 %v341, %v341
  %v374 = vpack.c.b16 %v342, %v342
  %v375 = vpack.c.b16 %v343, %v343
  %v376 = vpack.c.b16 %v344, %v344
  %v377 = vpack.c.b16 %v345, %v345
  %v378 = vpack.c.b16 %v346, %v346
  %vm379 = vsmask.f32 7424
  %v381 = vshrl.u32 %v251, 16
  %v383 = vshll.u32 %v251, 16
  %v385 = vrot.slane %v383, 1
  %v386 = vor.u32 %v381, %v385
  %v388 = vshll.u32 %v347, 16
  %v390 = vrot.slane %v388, 1
  %v391 = vsel %vm379, %v386, %v390
  %v393 = vshrl.u32 %v252, 16
  %v395 = vshll.u32 %v252, 16
  %v397 = vrot.slane %v395, 1
  %v398 = vor.u32 %v393, %v397
  %v400 = vshll.u32 %v348, 16
  %v402 = vrot.slane %v400, 1
  %v403 = vsel %vm379, %v398, %v402
  %v405 = vshrl.u32 %v253, 16
  %v407 = vshll.u32 %v253, 16
  %v409 = vrot.slane %v407, 1
  %v410 = vor.u32 %v405, %v409
  %v412 = vshll.u32 %v349, 16
  %v414 = vrot.slane %v412, 1
  %v415 = vsel %vm379, %v410, %v414
  %v417 = vshrl.u32 %v254, 16
  %v419 = vshll.u32 %v254, 16
  %v421 = vrot.slane %v419, 1
  %v422 = vor.u32 %v417, %v421
  %v424 = vshll.u32 %v350, 16
  %v426 = vrot.slane %v424, 1
  %v427 = vsel %vm379, %v422, %v426
  %v429 = vshrl.u32 %v255, 16
  %v431 = vshll.u32 %v255, 16
  %v433 = vrot.slane %v431, 1
  %v434 = vor.u32 %v429, %v433
  %v436 = vshll.u32 %v351, 16
  %v438 = vrot.slane %v436, 1
  %v439 = vsel %vm379, %v434, %v438
  %v441 = vshrl.u32 %v256, 16
  %v443 = vshll.u32 %v256, 16
  %v445 = vrot.slane %v443, 1
  %v446 = vor.u32 %v441, %v445
  %v448 = vshll.u32 %v352, 16
  %v450 = vrot.slane %v448, 1
  %v451 = vsel %vm379, %v446, %v450
  %v453 = vshrl.u32 %v257, 16
  %v455 = vshll.u32 %v257, 16
  %v457 = vrot.slane %v455, 1
  %v458 = vor.u32 %v453, %v457
  %v460 = vshll.u32 %v353, 16
  %v462 = vrot.slane %v460, 1
  %v463 = vsel %vm379, %v458, %v462
  %v465 = vshrl.u32 %v258, 16
  %v467 = vshll.u32 %v258, 16
  %v469 = vrot.slane %v467, 1
  %v470 = vor.u32 %v465, %v469
  %v472 = vshll.u32 %v354, 16
  %v474 = vrot.slane %v472, 1
  %v475 = vsel %vm379, %v470, %v474
  %v477 = vshrl.u32 %v259, 16
  %v479 = vshll.u32 %v259, 16
  %v481 = vrot.slane %v479, 1
  %v482 = vor.u32 %v477, %v481
  %v484 = vshll.u32 %v355, 16
  %v486 = vrot.slane %v484, 1
  %v487 = vsel %vm379, %v482, %v486
  %v489 = vshrl.u32 %v260, 16
  %v491 = vshll.u32 %v260, 16
  %v493 = vrot.slane %v491, 1
  %v494 = vor.u32 %v489, %v493
  %v496 = vshll.u32 %v356, 16
  %v498 = vrot.slane %v496, 1
  %v499 = vsel %vm379, %v494, %v498
  %v501 = vshrl.u32 %v261, 16
  %v503 = vshll.u32 %v261, 16
  %v505 = vrot.slane %v503, 1
  %v506 = vor.u32 %v501, %v505
  %v508 = vshll.u32 %v357, 16
  %v510 = vrot.slane %v508, 1
  %v511 = vsel %vm379, %v506, %v510
  %v513 = vshrl.u32 %v262, 16
  %v515 = vshll.u32 %v262, 16
  %v517 = vrot.slane %v515, 1
  %v518 = vor.u32 %v513, %v517
  %v520 = vshll.u32 %v358, 16
  %v522 = vrot.slane %v520, 1
  %v523 = vsel %vm379, %v518, %v522
  %v525 = vshrl.u32 %v263, 16
  %v527 = vshll.u32 %v263, 16
  %v529 = vrot.slane %v527, 1
  %v530 = vor.u32 %v525, %v529
  %v532 = vshll.u32 %v359, 16
  %v534 = vrot.slane %v532, 1
  %v535 = vsel %vm379, %v530, %v534
  %v537 = vshrl.u32 %v264, 16
  %v539 = vshll.u32 %v264, 16
  %v541 = vrot.slane %v539, 1
  %v542 = vor.u32 %v537, %v541
  %v544 = vshll.u32 %v360, 16
  %v546 = vrot.slane %v544, 1
  %v547 = vsel %vm379, %v542, %v546
  %v549 = vshrl.u32 %v265, 16
  %v551 = vshll.u32 %v265, 16
  %v553 = vrot.slane %v551, 1
  %v554 = vor.u32 %v549, %v553
  %v556 = vshll.u32 %v361, 16
  %v558 = vrot.slane %v556, 1
  %v559 = vsel %vm379, %v554, %v558
  %v561 = vshrl.u32 %v266, 16
  %v563 = vshll.u32 %v266, 16
  %v565 = vrot.slane %v563, 1
  %v566 = vor.u32 %v561, %v565
  %v568 = vshll.u32 %v362, 16
  %v570 = vrot.slane %v568, 1
  %v571 = vsel %vm379, %v566, %v570
  %v573 = vshrl.u32 %v267, 16
  %v575 = vshll.u32 %v267, 16
  %v577 = vrot.slane %v575, 1
  %v578 = vor.u32 %v573, %v577
  %v580 = vshll.u32 %v363, 16
  %v582 = vrot.slane %v580, 1
  %v583 = vsel %vm379, %v578, %v582
  %v585 = vshrl.u32 %v268, 16
  %v587 = vshll.u32 %v268, 16
  %v589 = vrot.slane %v587, 1
  %v590 = vor.u32 %v585, %v589
  %v592 = vshll.u32 %v364, 16
  %v594 = vrot.slane %v592, 1
  %v595 = vsel %vm379, %v590, %v594
  %v597 = vshrl.u32 %v269, 16
  %v599 = vshll.u32 %v269, 16
  %v601 = vrot.slane %v599, 1
  %v602 = vor.u32 %v597, %v601
  %v604 = vshll.u32 %v365, 16
  %v606 = vrot.slane %v604, 1
  %v607 = vsel %vm379, %v602, %v606
  %v609 = vshrl.u32 %v270, 16
  %v611 = vshll.u32 %v270, 16
  %v613 = vrot.slane %v611, 1
  %v614 = vor.u32 %v609, %v613
  %v616 = vshll.u32 %v366, 16
  %v618 = vrot.slane %v616, 1
  %v619 = vsel %vm379, %v614, %v618
  %v621 = vshrl.u32 %v271, 16
  %v623 = vshll.u32 %v271, 16
  %v625 = vrot.slane %v623, 1
  %v626 = vor.u32 %v621, %v625
  %v628 = vshll.u32 %v367, 16
  %v630 = vrot.slane %v628, 1
  %v631 = vsel %vm379, %v626, %v630
  %v633 = vshrl.u32 %v272, 16
  %v635 = vshll.u32 %v272, 16
  %v637 = vrot.slane %v635, 1
  %v638 = vor.u32 %v633, %v637
  %v640 = vshll.u32 %v368, 16
  %v642 = vrot.slane %v640, 1
  %v643 = vsel %vm379, %v638, %v642
  %v645 = vshrl.u32 %v273, 16
  %v647 = vshll.u32 %v273, 16
  %v649 = vrot.slane %v647, 1
  %v650 = vor.u32 %v645, %v649
  %v652 = vshll.u32 %v369, 16
  %v654 = vrot.slane %v652, 1
  %v655 = vsel %vm379, %v650, %v654
  %v657 = vshrl.u32 %v274, 16
  %v659 = vshll.u32 %v274, 16
  %v661 = vrot.slane %v659, 1
  %v662 = vor.u32 %v657, %v661
  %v664 = vshll.u32 %v370, 16
  %v666 = vrot.slane %v664, 1
  %v667 = vsel %vm379, %v662, %v666
  %v669 = vshrl.u32 %v275, 16
  %v671 = vshll.u32 %v275, 16
  %v673 = vrot.slane %v671, 1
  %v674 = vor.u32 %v669, %v673
  %v676 = vshll.u32 %v371, 16
  %v678 = vrot.slane %v676, 1
  %v679 = vsel %vm379, %v674, %v678
  %v681 = vshrl.u32 %v276, 16
  %v683 = vshll.u32 %v276, 16
  %v685 = vrot.slane %v683, 1
  %v686 = vor.u32 %v681, %v685
  %v688 = vshll.u32 %v372, 16
  %v690 = vrot.slane %v688, 1
  %v691 = vsel %vm379, %v686, %v690
  %v693 = vshrl.u32 %v277, 16
  %v695 = vshll.u32 %v277, 16
  %v697 = vrot.slane %v695, 1
  %v698 = vor.u32 %v693, %v697
  %v700 = vshll.u32 %v373, 16
  %v702 = vrot.slane %v700, 1
  %v703 = vsel %vm379, %v698, %v702
  %v705 = vshrl.u32 %v278, 16
  %v707 = vshll.u32 %v278, 16
  %v709 = vrot.slane %v707, 1
  %v710 = vor.u32 %v705, %v709
  %v712 = vshll.u32 %v374, 16
  %v714 = vrot.slane %v712, 1
  %v715 = vsel %vm379, %v710, %v714
  %v717 = vshrl.u32 %v279, 16
  %v719 = vshll.u32 %v279, 16
  %v721 = vrot.slane %v719, 1
  %v722 = vor.u32 %v717, %v721
  %v724 = vshll.u32 %v375, 16
  %v726 = vrot.slane %v724, 1
  %v727 = vsel %vm379, %v722, %v726
  %v729 = vshrl.u32 %v280, 16
  %v731 = vshll.u32 %v280, 16
  %v733 = vrot.slane %v731, 1
  %v734 = vor.u32 %v729, %v733
  %v736 = vshll.u32 %v376, 16
  %v738 = vrot.slane %v736, 1
  %v739 = vsel %vm379, %v734, %v738
  %v741 = vshrl.u32 %v281, 16
  %v743 = vshll.u32 %v281, 16
  %v745 = vrot.slane %v743, 1
  %v746 = vor.u32 %v741, %v745
  %v748 = vshll.u32 %v377, 16
  %v750 = vrot.slane %v748, 1
  %v751 = vsel %vm379, %v746, %v750
  %v753 = vshrl.u32 %v282, 16
  %v755 = vshll.u32 %v282, 16
  %v757 = vrot.slane %v755, 1
  %v758 = vor.u32 %v753, %v757
  %v760 = vshll.u32 %v378, 16
  %v762 = vrot.slane %v760, 1
  %v763 = vsel %vm379, %v758, %v762
  %764 = vrot.lane.b32.xlu0 %v391, 4
  %v765 = vpop.permute.xlu0 %764
  %766 = vrot.lane.b32.xlu0 %v403, 4
  %v767 = vpop.permute.xlu0 %766
  %768 = vrot.lane.b32.xlu0 %v415, 4
  %v769 = vpop.permute.xlu0 %768
  %770 = vrot.lane.b32.xlu0 %v427, 4
  %v771 = vpop.permute.xlu0 %770
  %772 = vrot.lane.b32.xlu0 %v439, 4
  %v773 = vpop.permute.xlu0 %772
  %774 = vrot.lane.b32.xlu0 %v451, 4
  %v775 = vpop.permute.xlu0 %774
  %776 = vrot.lane.b32.xlu0 %v463, 4
  %v777 = vpop.permute.xlu0 %776
  %778 = vrot.lane.b32.xlu0 %v475, 4
  %v779 = vpop.permute.xlu0 %778
  %780 = vrot.lane.b32.xlu0 %v487, 4
  %v781 = vpop.permute.xlu0 %780
  %782 = vrot.lane.b32.xlu0 %v499, 4
  %v783 = vpop.permute.xlu0 %782
  %784 = vrot.lane.b32.xlu0 %v511, 4
  %v785 = vpop.permute.xlu0 %784
  %786 = vrot.lane.b32.xlu0 %v523, 4
  %v787 = vpop.permute.xlu0 %786
  %788 = vrot.lane.b32.xlu0 %v535, 4
  %v789 = vpop.permute.xlu0 %788
  %790 = vrot.lane.b32.xlu0 %v547, 4
  %v791 = vpop.permute.xlu0 %790
  %792 = vrot.lane.b32.xlu0 %v559, 4
  %v793 = vpop.permute.xlu0 %792
  %794 = vrot.lane.b32.xlu0 %v571, 4
  %v795 = vpop.permute.xlu0 %794
  %796 = vrot.lane.b32.xlu0 %v583, 4
  %v797 = vpop.permute.xlu0 %796
  %798 = vrot.lane.b32.xlu0 %v595, 4
  %v799 = vpop.permute.xlu0 %798
  %800 = vrot.lane.b32.xlu0 %v607, 4
  %v801 = vpop.permute.xlu0 %800
  %802 = vrot.lane.b32.xlu0 %v619, 4
  %v803 = vpop.permute.xlu0 %802
  %804 = vrot.lane.b32.xlu0 %v631, 4
  %v805 = vpop.permute.xlu0 %804
  %806 = vrot.lane.b32.xlu0 %v643, 4
  %v807 = vpop.permute.xlu0 %806
  %808 = vrot.lane.b32.xlu0 %v655, 4
  %v809 = vpop.permute.xlu0 %808
  %810 = vrot.lane.b32.xlu0 %v667, 4
  %v811 = vpop.permute.xlu0 %810
  %812 = vrot.lane.b32.xlu0 %v679, 4
  %v813 = vpop.permute.xlu0 %812
  %814 = vrot.lane.b32.xlu0 %v691, 4
  %v815 = vpop.permute.xlu0 %814
  %816 = vrot.lane.b32.xlu0 %v703, 4
  %v817 = vpop.permute.xlu0 %816
  %818 = vrot.lane.b32.xlu0 %v715, 4
  %v819 = vpop.permute.xlu0 %818
  %820 = vrot.lane.b32.xlu0 %v727, 4
  %v821 = vpop.permute.xlu0 %820
  %822 = vrot.lane.b32.xlu0 %v739, 4
  %v823 = vpop.permute.xlu0 %822
  %824 = vrot.lane.b32.xlu0 %v751, 4
  %v825 = vpop.permute.xlu0 %824
  %826 = vrot.lane.b32.xlu0 %v763, 4
  %v827 = vpop.permute.xlu0 %826
  %vm828 = vcmask 1046528
  %v829 = vrot.slane %v251, 1
  %v830 = vrot.slane %v347, 1
  %v831 = vsel %vm828, %v829, %v830
  %v832 = vrot.slane %v252, 1
  %v833 = vrot.slane %v348, 1
  %v834 = vsel %vm828, %v832, %v833
  %v835 = vrot.slane %v253, 1
  %v836 = vrot.slane %v349, 1
  %v837 = vsel %vm828, %v835, %v836
  %v838 = vrot.slane %v254, 1
  %v839 = vrot.slane %v350, 1
  %v840 = vsel %vm828, %v838, %v839
  %v841 = vrot.slane %v255, 1
  %v842 = vrot.slane %v351, 1
  %v843 = vsel %vm828, %v841, %v842
  %v844 = vrot.slane %v256, 1
  %v845 = vrot.slane %v352, 1
  %v846 = vsel %vm828, %v844, %v845
  %v847 = vrot.slane %v257, 1
  %v848 = vrot.slane %v353, 1
  %v849 = vsel %vm828, %v847, %v848
  %v850 = vrot.slane %v258, 1
  %v851 = vrot.slane %v354, 1
  %v852 = vsel %vm828, %v850, %v851
  %v853 = vrot.slane %v259, 1
  %v854 = vrot.slane %v355, 1
  %v855 = vsel %vm828, %v853, %v854
  %v856 = vrot.slane %v260, 1
  %v857 = vrot.slane %v356, 1
  %v858 = vsel %vm828, %v856, %v857
  %v859 = vrot.slane %v261, 1
  %v860 = vrot.slane %v357, 1
  %v861 = vsel %vm828, %v859, %v860
  %v862 = vrot.slane %v262, 1
  %v863 = vrot.slane %v358, 1
  %v864 = vsel %vm828, %v862, %v863
  %v865 = vrot.slane %v263, 1
  %v866 = vrot.slane %v359, 1
  %v867 = vsel %vm828, %v865, %v866
  %v868 = vrot.slane %v264, 1
  %v869 = vrot.slane %v360, 1
  %v870 = vsel %vm828, %v868, %v869
  %v871 = vrot.slane %v265, 1
  %v872 = vrot.slane %v361, 1
  %v873 = vsel %vm828, %v871, %v872
  %v874 = vrot.slane %v266, 1
  %v875 = vrot.slane %v362, 1
  %v876 = vsel %vm828, %v874, %v875
  %v877 = vrot.slane %v267, 1
  %v878 = vrot.slane %v363, 1
  %v879 = vsel %vm828, %v877, %v878
  %v880 = vrot.slane %v268, 1
  %v881 = vrot.slane %v364, 1
  %v882 = vsel %vm828, %v880, %v881
  %v883 = vrot.slane %v269, 1
  %v884 = vrot.slane %v365, 1
  %v885 = vsel %vm828, %v883, %v884
  %v886 = vrot.slane %v270, 1
  %v887 = vrot.slane %v366, 1
  %v888 = vsel %vm828, %v886, %v887
  %v889 = vrot.slane %v271, 1
  %v890 = vrot.slane %v367, 1
  %v891 = vsel %vm828, %v889, %v890
  %v892 = vrot.slane %v272, 1
  %v893 = vrot.slane %v368, 1
  %v894 = vsel %vm828, %v892, %v893
  %v895 = vrot.slane %v273, 1
  %v896 = vrot.slane %v369, 1
  %v897 = vsel %vm828, %v895, %v896
  %v898 = vrot.slane %v274, 1
  %v899 = vrot.slane %v370, 1
  %v900 = vsel %vm828, %v898, %v899
  %v901 = vrot.slane %v275, 1
  %v902 = vrot.slane %v371, 1
  %v903 = vsel %vm828, %v901, %v902
  %v904 = vrot.slane %v276, 1
  %v905 = vrot.slane %v372, 1
  %v906 = vsel %vm828, %v904, %v905
  %v907 = vrot.slane %v277, 1
  %v908 = vrot.slane %v373, 1
  %v909 = vsel %vm828, %v907, %v908
  %v910 = vrot.slane %v278, 1
  %v911 = vrot.slane %v374, 1
  %v912 = vsel %vm828, %v910, %v911
  %v913 = vrot.slane %v279, 1
  %v914 = vrot.slane %v375, 1
  %v915 = vsel %vm828, %v913, %v914
  %v916 = vrot.slane %v280, 1
  %v917 = vrot.slane %v376, 1
  %v918 = vsel %vm828, %v916, %v917
  %v919 = vrot.slane %v281, 1
  %v920 = vrot.slane %v377, 1
  %v921 = vsel %vm828, %v919, %v920
  %v922 = vrot.slane %v282, 1
  %v923 = vrot.slane %v378, 1
  %v924 = vsel %vm828, %v922, %v923
  %925 = vrot.lane.b32.xlu0 %v831, 8
  %v926 = vpop.permute.xlu0 %925
  %927 = vrot.lane.b32.xlu0 %v834, 8
  %v928 = vpop.permute.xlu0 %927
  %929 = vrot.lane.b32.xlu0 %v837, 8
  %v930 = vpop.permute.xlu0 %929
  %931 = vrot.lane.b32.xlu0 %v840, 8
  %v932 = vpop.permute.xlu0 %931
  %933 = vrot.lane.b32.xlu0 %v843, 8
  %v934 = vpop.permute.xlu0 %933
  %935 = vrot.lane.b32.xlu0 %v846, 8
  %v936 = vpop.permute.xlu0 %935
  %937 = vrot.lane.b32.xlu0 %v849, 8
  %v938 = vpop.permute.xlu0 %937
  %939 = vrot.lane.b32.xlu0 %v852, 8
  %v940 = vpop.permute.xlu0 %939
  %941 = vrot.lane.b32.xlu0 %v855, 8
  %v942 = vpop.permute.xlu0 %941
  %943 = vrot.lane.b32.xlu0 %v858, 8
  %v944 = vpop.permute.xlu0 %943
  %945 = vrot.lane.b32.xlu0 %v861, 8
  %v946 = vpop.permute.xlu0 %945
  %947 = vrot.lane.b32.xlu0 %v864, 8
  %v948 = vpop.permute.xlu0 %947
  %949 = vrot.lane.b32.xlu0 %v867, 8
  %v950 = vpop.permute.xlu0 %949
  %951 = vrot.lane.b32.xlu0 %v870, 8
  %v952 = vpop.permute.xlu0 %951
  %953 = vrot.lane.b32.xlu0 %v873, 8
  %v954 = vpop.permute.xlu0 %953
  %955 = vrot.lane.b32.xlu0 %v876, 8
  %v956 = vpop.permute.xlu0 %955
  %957 = vrot.lane.b32.xlu0 %v879, 8
  %v958 = vpop.permute.xlu0 %957
  %959 = vrot.lane.b32.xlu0 %v882, 8
  %v960 = vpop.permute.xlu0 %959
  %961 = vrot.lane.b32.xlu0 %v885, 8
  %v962 = vpop.permute.xlu0 %961
  %963 = vrot.lane.b32.xlu0 %v888, 8
  %v964 = vpop.permute.xlu0 %963
  %965 = vrot.lane.b32.xlu0 %v891, 8
  %v966 = vpop.permute.xlu0 %965
  %967 = vrot.lane.b32.xlu0 %v894, 8
  %v968 = vpop.permute.xlu0 %967
  %969 = vrot.lane.b32.xlu0 %v897, 8
  %v970 = vpop.permute.xlu0 %969
  %971 = vrot.lane.b32.xlu0 %v900, 8
  %v972 = vpop.permute.xlu0 %971
  %973 = vrot.lane.b32.xlu0 %v903, 8
  %v974 = vpop.permute.xlu0 %973
  %975 = vrot.lane.b32.xlu0 %v906, 8
  %v976 = vpop.permute.xlu0 %975
  %977 = vrot.lane.b32.xlu0 %v909, 8
  %v978 = vpop.permute.xlu0 %977
  %979 = vrot.lane.b32.xlu0 %v912, 8
  %v980 = vpop.permute.xlu0 %979
  %981 = vrot.lane.b32.xlu0 %v915, 8
  %v982 = vpop.permute.xlu0 %981
  %983 = vrot.lane.b32.xlu0 %v918, 8
  %v984 = vpop.permute.xlu0 %983
  %985 = vrot.lane.b32.xlu0 %v921, 8
  %v986 = vpop.permute.xlu0 %985
  %987 = vrot.lane.b32.xlu0 %v924, 8
  %v988 = vpop.permute.xlu0 %987
  %v993 = vunpack.c.l.b16 %v63
  %v994 = vunpack.c.l.b16 %v64
  %v995 = vunpack.c.l.b16 %v117
  %v996 = vunpack.c.l.b16 %v118
  %v997 = vpack.c.b16 %v994, %v993
  %v998 = vpack.c.b16 %v996, %v995
  %999 = vrot.lane.b32.xlu0 %v252, 12
  %v1000 = vpop.permute.xlu0 %999
  %1001 = vrot.lane.b32.xlu0 %v253, 12
  %v1002 = vpop.permute.xlu0 %1001
  %1003 = vrot.lane.b32.xlu0 %v254, 12
  %v1004 = vpop.permute.xlu0 %1003
  %1005 = vrot.lane.b32.xlu0 %v255, 12
  %v1006 = vpop.permute.xlu0 %1005
  %1007 = vrot.lane.b32.xlu0 %v256, 12
  %v1008 = vpop.permute.xlu0 %1007
  %1009 = vrot.lane.b32.xlu0 %v257, 12
  %v1010 = vpop.permute.xlu0 %1009
  %1011 = vrot.lane.b32.xlu0 %v258, 12
  %v1012 = vpop.permute.xlu0 %1011
  %1013 = vrot.lane.b32.xlu0 %v259, 12
  %v1014 = vpop.permute.xlu0 %1013
  %1015 = vrot.lane.b32.xlu0 %v260, 12
  %v1016 = vpop.permute.xlu0 %1015
  %1017 = vrot.lane.b32.xlu0 %v261, 12
  %v1018 = vpop.permute.xlu0 %1017
  %1019 = vrot.lane.b32.xlu0 %v262, 12
  %v1020 = vpop.permute.xlu0 %1019
  %1021 = vrot.lane.b32.xlu0 %v263, 12
  %v1022 = vpop.permute.xlu0 %1021
  %1023 = vrot.lane.b32.xlu0 %v264, 12
  %v1024 = vpop.permute.xlu0 %1023
  %1025 = vrot.lane.b32.xlu0 %v265, 12
  %v1026 = vpop.permute.xlu0 %1025
  %1027 = vrot.lane.b32.xlu0 %v266, 12
  %v1028 = vpop.permute.xlu0 %1027
  %1029 = vrot.lane.b32.xlu0 %v997, 12
  %v1030 = vpop.permute.xlu0 %1029
  %1031 = vrot.lane.b32.xlu0 %v268, 12
  %v1032 = vpop.permute.xlu0 %1031
  %1033 = vrot.lane.b32.xlu0 %v269, 12
  %v1034 = vpop.permute.xlu0 %1033
  %1035 = vrot.lane.b32.xlu0 %v270, 12
  %v1036 = vpop.permute.xlu0 %1035
  %1037 = vrot.lane.b32.xlu0 %v271, 12
  %v1038 = vpop.permute.xlu0 %1037
  %1039 = vrot.lane.b32.xlu0 %v272, 12
  %v1040 = vpop.permute.xlu0 %1039
  %1041 = vrot.lane.b32.xlu0 %v273, 12
  %v1042 = vpop.permute.xlu0 %1041
  %1043 = vrot.lane.b32.xlu0 %v274, 12
  %v1044 = vpop.permute.xlu0 %1043
  %1045 = vrot.lane.b32.xlu0 %v275, 12
  %v1046 = vpop.permute.xlu0 %1045
  %1047 = vrot.lane.b32.xlu0 %v276, 12
  %v1048 = vpop.permute.xlu0 %1047
  %1049 = vrot.lane.b32.xlu0 %v277, 12
  %v1050 = vpop.permute.xlu0 %1049
  %1051 = vrot.lane.b32.xlu0 %v278, 12
  %v1052 = vpop.permute.xlu0 %1051
  %1053 = vrot.lane.b32.xlu0 %v279, 12
  %v1054 = vpop.permute.xlu0 %1053
  %1055 = vrot.lane.b32.xlu0 %v280, 12
  %v1056 = vpop.permute.xlu0 %1055
  %1057 = vrot.lane.b32.xlu0 %v281, 12
  %v1058 = vpop.permute.xlu0 %1057
  %1059 = vrot.lane.b32.xlu0 %v282, 12
  %v1060 = vpop.permute.xlu0 %1059
  %1061 = vrot.lane.b32.xlu0 %v998, 12
  %v1062 = vpop.permute.xlu0 %1061
  %v1065 = vunpack.c.l.b16 %v65
  %v1066 = vunpack.c.l.b16 %v119
  %v1067 = vpack.c.b16 %v1065, %v1065
  %v1068 = vpack.c.b16 %v1066, %v1066
  %v1070 = vshrl.u32 %v997, 16
  %v1072 = vshll.u32 %v997, 16
  %v1074 = vrot.slane %v1072, 1
  %v1075 = vor.u32 %v1070, %v1074
  %v1077 = vshll.u32 %v1067, 16
  %v1079 = vrot.slane %v1077, 1
  %v1080 = vsel %vm379, %v1075, %v1079
  %v1082 = vshrl.u32 %v998, 16
  %v1084 = vshll.u32 %v998, 16
  %v1086 = vrot.slane %v1084, 1
  %v1087 = vor.u32 %v1082, %v1086
  %v1089 = vshll.u32 %v1068, 16
  %v1091 = vrot.slane %v1089, 1
  %v1092 = vsel %vm379, %v1087, %v1091
  %1093 = vrot.lane.b32.xlu0 %v403, 16
  %v1094 = vpop.permute.xlu0 %1093
  %1095 = vrot.lane.b32.xlu0 %v415, 16
  %v1096 = vpop.permute.xlu0 %1095
  %1097 = vrot.lane.b32.xlu0 %v427, 16
  %v1098 = vpop.permute.xlu0 %1097
  %1099 = vrot.lane.b32.xlu0 %v439, 16
  %v1100 = vpop.permute.xlu0 %1099
  %1101 = vrot.lane.b32.xlu0 %v451, 16
  %v1102 = vpop.permute.xlu0 %1101
  %1103 = vrot.lane.b32.xlu0 %v463, 16
  %v1104 = vpop.permute.xlu0 %1103
  %1105 = vrot.lane.b32.xlu0 %v475, 16
  %v1106 = vpop.permute.xlu0 %1105
  %1107 = vrot.lane.b32.xlu0 %v487, 16
  %v1108 = vpop.permute.xlu0 %1107
  %1109 = vrot.lane.b32.xlu0 %v499, 16
  %v1110 = vpop.permute.xlu0 %1109
  %1111 = vrot.lane.b32.xlu0 %v511, 16
  %v1112 = vpop.permute.xlu0 %1111
  %1113 = vrot.lane.b32.xlu0 %v523, 16
  %v1114 = vpop.permute.xlu0 %1113
  %1115 = vrot.lane.b32.xlu0 %v535, 16
  %v1116 = vpop.permute.xlu0 %1115
  %1117 = vrot.lane.b32.xlu0 %v547, 16
  %v1118 = vpop.permute.xlu0 %1117
  %1119 = vrot.lane.b32.xlu0 %v559, 16
  %v1120 = vpop.permute.xlu0 %1119
  %1121 = vrot.lane.b32.xlu0 %v571, 16
  %v1122 = vpop.permute.xlu0 %1121
  %1123 = vrot.lane.b32.xlu0 %v1080, 16
  %v1124 = vpop.permute.xlu0 %1123
  %1125 = vrot.lane.b32.xlu0 %v595, 16
  %v1126 = vpop.permute.xlu0 %1125
  %1127 = vrot.lane.b32.xlu0 %v607, 16
  %v1128 = vpop.permute.xlu0 %1127
  %1129 = vrot.lane.b32.xlu0 %v619, 16
  %v1130 = vpop.permute.xlu0 %1129
  %1131 = vrot.lane.b32.xlu0 %v631, 16
  %v1132 = vpop.permute.xlu0 %1131
  %1133 = vrot.lane.b32.xlu0 %v643, 16
  %v1134 = vpop.permute.xlu0 %1133
  %1135 = vrot.lane.b32.xlu0 %v655, 16
  %v1136 = vpop.permute.xlu0 %1135
  %1137 = vrot.lane.b32.xlu0 %v667, 16
  %v1138 = vpop.permute.xlu0 %1137
  %1139 = vrot.lane.b32.xlu0 %v679, 16
  %v1140 = vpop.permute.xlu0 %1139
  %1141 = vrot.lane.b32.xlu0 %v691, 16
  %v1142 = vpop.permute.xlu0 %1141
  %1143 = vrot.lane.b32.xlu0 %v703, 16
  %v1144 = vpop.permute.xlu0 %1143
  %1145 = vrot.lane.b32.xlu0 %v715, 16
  %v1146 = vpop.permute.xlu0 %1145
  %1147 = vrot.lane.b32.xlu0 %v727, 16
  %v1148 = vpop.permute.xlu0 %1147
  %1149 = vrot.lane.b32.xlu0 %v739, 16
  %v1150 = vpop.permute.xlu0 %1149
  %1151 = vrot.lane.b32.xlu0 %v751, 16
  %v1152 = vpop.permute.xlu0 %1151
  %1153 = vrot.lane.b32.xlu0 %v763, 16
  %v1154 = vpop.permute.xlu0 %1153
  %1155 = vrot.lane.b32.xlu0 %v1092, 16
  %v1156 = vpop.permute.xlu0 %1155
  %v1157 = vrot.slane %v997, 1
  %v1158 = vrot.slane %v1067, 1
  %v1159 = vsel %vm828, %v1157, %v1158
  %v1160 = vrot.slane %v998, 1
  %v1161 = vrot.slane %v1068, 1
  %v1162 = vsel %vm828, %v1160, %v1161
  %1163 = vrot.lane.b32.xlu0 %v834, 20
  %v1164 = vpop.permute.xlu0 %1163
  %1165 = vrot.lane.b32.xlu0 %v837, 20
  %v1166 = vpop.permute.xlu0 %1165
  %1167 = vrot.lane.b32.xlu0 %v840, 20
  %v1168 = vpop.permute.xlu0 %1167
  %1169 = vrot.lane.b32.xlu0 %v843, 20
  %v1170 = vpop.permute.xlu0 %1169
  %1171 = vrot.lane.b32.xlu0 %v846, 20
  %v1172 = vpop.permute.xlu0 %1171
  %1173 = vrot.lane.b32.xlu0 %v849, 20
  %v1174 = vpop.permute.xlu0 %1173
  %1175 = vrot.lane.b32.xlu0 %v852, 20
  %v1176 = vpop.permute.xlu0 %1175
  %1177 = vrot.lane.b32.xlu0 %v855, 20
  %v1178 = vpop.permute.xlu0 %1177
  %1179 = vrot.lane.b32.xlu0 %v858, 20
  %v1180 = vpop.permute.xlu0 %1179
  %1181 = vrot.lane.b32.xlu0 %v861, 20
  %v1182 = vpop.permute.xlu0 %1181
  %1183 = vrot.lane.b32.xlu0 %v864, 20
  %v1184 = vpop.permute.xlu0 %1183
  %1185 = vrot.lane.b32.xlu0 %v867, 20
  %v1186 = vpop.permute.xlu0 %1185
  %1187 = vrot.lane.b32.xlu0 %v870, 20
  %v1188 = vpop.permute.xlu0 %1187
  %1189 = vrot.lane.b32.xlu0 %v873, 20
  %v1190 = vpop.permute.xlu0 %1189
  %1191 = vrot.lane.b32.xlu0 %v876, 20
  %v1192 = vpop.permute.xlu0 %1191
  %1193 = vrot.lane.b32.xlu0 %v1159, 20
  %v1194 = vpop.permute.xlu0 %1193
  %1195 = vrot.lane.b32.xlu0 %v882, 20
  %v1196 = vpop.permute.xlu0 %1195
  %1197 = vrot.lane.b32.xlu0 %v885, 20
  %v1198 = vpop.permute.xlu0 %1197
  %1199 = vrot.lane.b32.xlu0 %v888, 20
  %v1200 = vpop.permute.xlu0 %1199
  %1201 = vrot.lane.b32.xlu0 %v891, 20
  %v1202 = vpop.permute.xlu0 %1201
  %1203 = vrot.lane.b32.xlu0 %v894, 20
  %v1204 = vpop.permute.xlu0 %1203
  %1205 = vrot.lane.b32.xlu0 %v897, 20
  %v1206 = vpop.permute.xlu0 %1205
  %1207 = vrot.lane.b32.xlu0 %v900, 20
  %v1208 = vpop.permute.xlu0 %1207
  %1209 = vrot.lane.b32.xlu0 %v903, 20
  %v1210 = vpop.permute.xlu0 %1209
  %1211 = vrot.lane.b32.xlu0 %v906, 20
  %v1212 = vpop.permute.xlu0 %1211
  %1213 = vrot.lane.b32.xlu0 %v909, 20
  %v1214 = vpop.permute.xlu0 %1213
  %1215 = vrot.lane.b32.xlu0 %v912, 20
  %v1216 = vpop.permute.xlu0 %1215
  %1217 = vrot.lane.b32.xlu0 %v915, 20
  %v1218 = vpop.permute.xlu0 %1217
  %1219 = vrot.lane.b32.xlu0 %v918, 20
  %v1220 = vpop.permute.xlu0 %1219
  %1221 = vrot.lane.b32.xlu0 %v921, 20
  %v1222 = vpop.permute.xlu0 %1221
  %1223 = vrot.lane.b32.xlu0 %v924, 20
  %v1224 = vpop.permute.xlu0 %1223
  %1225 = vrot.lane.b32.xlu0 %v1162, 20
  %v1226 = vpop.permute.xlu0 %1225
  %v1231 = vunpack.c.l.b16 %v66
  %v1232 = vunpack.c.l.b16 %v67
  %v1233 = vunpack.c.l.b16 %v120
  %v1234 = vunpack.c.l.b16 %v121
  %v1235 = vpack.c.b16 %v1232, %v1231
  %v1236 = vpack.c.b16 %v1234, %v1233
  %1237 = vrot.lane.b32.xlu0 %v253, 24
  %v1238 = vpop.permute.xlu0 %1237
  %1239 = vrot.lane.b32.xlu0 %v254, 24
  %v1240 = vpop.permute.xlu0 %1239
  %1241 = vrot.lane.b32.xlu0 %v255, 24
  %v1242 = vpop.permute.xlu0 %1241
  %1243 = vrot.lane.b32.xlu0 %v256, 24
  %v1244 = vpop.permute.xlu0 %1243
  %1245 = vrot.lane.b32.xlu0 %v257, 24
  %v1246 = vpop.permute.xlu0 %1245
  %1247 = vrot.lane.b32.xlu0 %v258, 24
  %v1248 = vpop.permute.xlu0 %1247
  %1249 = vrot.lane.b32.xlu0 %v259, 24
  %v1250 = vpop.permute.xlu0 %1249
  %1251 = vrot.lane.b32.xlu0 %v260, 24
  %v1252 = vpop.permute.xlu0 %1251
  %1253 = vrot.lane.b32.xlu0 %v261, 24
  %v1254 = vpop.permute.xlu0 %1253
  %1255 = vrot.lane.b32.xlu0 %v262, 24
  %v1256 = vpop.permute.xlu0 %1255
  %1257 = vrot.lane.b32.xlu0 %v263, 24
  %v1258 = vpop.permute.xlu0 %1257
  %1259 = vrot.lane.b32.xlu0 %v264, 24
  %v1260 = vpop.permute.xlu0 %1259
  %1261 = vrot.lane.b32.xlu0 %v265, 24
  %v1262 = vpop.permute.xlu0 %1261
  %1263 = vrot.lane.b32.xlu0 %v266, 24
  %v1264 = vpop.permute.xlu0 %1263
  %1265 = vrot.lane.b32.xlu0 %v997, 24
  %v1266 = vpop.permute.xlu0 %1265
  %1267 = vrot.lane.b32.xlu0 %v1235, 24
  %v1268 = vpop.permute.xlu0 %1267
  %1269 = vrot.lane.b32.xlu0 %v269, 24
  %v1270 = vpop.permute.xlu0 %1269
  %1271 = vrot.lane.b32.xlu0 %v270, 24
  %v1272 = vpop.permute.xlu0 %1271
  %1273 = vrot.lane.b32.xlu0 %v271, 24
  %v1274 = vpop.permute.xlu0 %1273
  %1275 = vrot.lane.b32.xlu0 %v272, 24
  %v1276 = vpop.permute.xlu0 %1275
  %1277 = vrot.lane.b32.xlu0 %v273, 24
  %v1278 = vpop.permute.xlu0 %1277
  %1279 = vrot.lane.b32.xlu0 %v274, 24
  %v1280 = vpop.permute.xlu0 %1279
  %1281 = vrot.lane.b32.xlu0 %v275, 24
  %v1282 = vpop.permute.xlu0 %1281
  %1283 = vrot.lane.b32.xlu0 %v276, 24
  %v1284 = vpop.permute.xlu0 %1283
  %1285 = vrot.lane.b32.xlu0 %v277, 24
  %v1286 = vpop.permute.xlu0 %1285
  %1287 = vrot.lane.b32.xlu0 %v278, 24
  %v1288 = vpop.permute.xlu0 %1287
  %1289 = vrot.lane.b32.xlu0 %v279, 24
  %v1290 = vpop.permute.xlu0 %1289
  %1291 = vrot.lane.b32.xlu0 %v280, 24
  %v1292 = vpop.permute.xlu0 %1291
  %1293 = vrot.lane.b32.xlu0 %v281, 24
  %v1294 = vpop.permute.xlu0 %1293
  %1295 = vrot.lane.b32.xlu0 %v282, 24
  %v1296 = vpop.permute.xlu0 %1295
  %1297 = vrot.lane.b32.xlu0 %v998, 24
  %v1298 = vpop.permute.xlu0 %1297
  %1299 = vrot.lane.b32.xlu0 %v1236, 24
  %v1300 = vpop.permute.xlu0 %1299
  %v1303 = vunpack.c.l.b16 %v68
  %v1304 = vunpack.c.l.b16 %v122
  %v1305 = vpack.c.b16 %v1303, %v1303
  %v1306 = vpack.c.b16 %v1304, %v1304
  %v1308 = vshrl.u32 %v1235, 16
  %v1310 = vshll.u32 %v1235, 16
  %v1312 = vrot.slane %v1310, 1
  %v1313 = vor.u32 %v1308, %v1312
  %v1315 = vshll.u32 %v1305, 16
  %v1317 = vrot.slane %v1315, 1
  %v1318 = vsel %vm379, %v1313, %v1317
  %v1320 = vshrl.u32 %v1236, 16
  %v1322 = vshll.u32 %v1236, 16
  %v1324 = vrot.slane %v1322, 1
  %v1325 = vor.u32 %v1320, %v1324
  %v1327 = vshll.u32 %v1306, 16
  %v1329 = vrot.slane %v1327, 1
  %v1330 = vsel %vm379, %v1325, %v1329
  %1331 = vrot.lane.b32.xlu0 %v415, 28
  %v1332 = vpop.permute.xlu0 %1331
  %1333 = vrot.lane.b32.xlu0 %v427, 28
  %v1334 = vpop.permute.xlu0 %1333
  %1335 = vrot.lane.b32.xlu0 %v439, 28
  %v1336 = vpop.permute.xlu0 %1335
  %1337 = vrot.lane.b32.xlu0 %v451, 28
  %v1338 = vpop.permute.xlu0 %1337
  %1339 = vrot.lane.b32.xlu0 %v463, 28
  %v1340 = vpop.permute.xlu0 %1339
  %1341 = vrot.lane.b32.xlu0 %v475, 28
  %v1342 = vpop.permute.xlu0 %1341
  %1343 = vrot.lane.b32.xlu0 %v487, 28
  %v1344 = vpop.permute.xlu0 %1343
  %1345 = vrot.lane.b32.xlu0 %v499, 28
  %v1346 = vpop.permute.xlu0 %1345
  %1347 = vrot.lane.b32.xlu0 %v511, 28
  %v1348 = vpop.permute.xlu0 %1347
  %1349 = vrot.lane.b32.xlu0 %v523, 28
  %v1350 = vpop.permute.xlu0 %1349
  %1351 = vrot.lane.b32.xlu0 %v535, 28
  %v1352 = vpop.permute.xlu0 %1351
  %1353 = vrot.lane.b32.xlu0 %v547, 28
  %v1354 = vpop.permute.xlu0 %1353
  %1355 = vrot.lane.b32.xlu0 %v559, 28
  %v1356 = vpop.permute.xlu0 %1355
  %1357 = vrot.lane.b32.xlu0 %v571, 28
  %v1358 = vpop.permute.xlu0 %1357
  %1359 = vrot.lane.b32.xlu0 %v1080, 28
  %v1360 = vpop.permute.xlu0 %1359
  %1361 = vrot.lane.b32.xlu0 %v1318, 28
  %v1362 = vpop.permute.xlu0 %1361
  %1363 = vrot.lane.b32.xlu0 %v607, 28
  %v1364 = vpop.permute.xlu0 %1363
  %1365 = vrot.lane.b32.xlu0 %v619, 28
  %v1366 = vpop.permute.xlu0 %1365
  %1367 = vrot.lane.b32.xlu0 %v631, 28
  %v1368 = vpop.permute.xlu0 %1367
  %1369 = vrot.lane.b32.xlu0 %v643, 28
  %v1370 = vpop.permute.xlu0 %1369
  %1371 = vrot.lane.b32.xlu0 %v655, 28
  %v1372 = vpop.permute.xlu0 %1371
  %1373 = vrot.lane.b32.xlu0 %v667, 28
  %v1374 = vpop.permute.xlu0 %1373
  %1375 = vrot.lane.b32.xlu0 %v679, 28
  %v1376 = vpop.permute.xlu0 %1375
  %1377 = vrot.lane.b32.xlu0 %v691, 28
  %v1378 = vpop.permute.xlu0 %1377
  %1379 = vrot.lane.b32.xlu0 %v703, 28
  %v1380 = vpop.permute.xlu0 %1379
  %1381 = vrot.lane.b32.xlu0 %v715, 28
  %v1382 = vpop.permute.xlu0 %1381
  %1383 = vrot.lane.b32.xlu0 %v727, 28
  %v1384 = vpop.permute.xlu0 %1383
  %1385 = vrot.lane.b32.xlu0 %v739, 28
  %v1386 = vpop.permute.xlu0 %1385
  %1387 = vrot.lane.b32.xlu0 %v751, 28
  %v1388 = vpop.permute.xlu0 %1387
  %1389 = vrot.lane.b32.xlu0 %v763, 28
  %v1390 = vpop.permute.xlu0 %1389
  %1391 = vrot.lane.b32.xlu0 %v1092, 28
  %v1392 = vpop.permute.xlu0 %1391
  %1393 = vrot.lane.b32.xlu0 %v1330, 28
  %v1394 = vpop.permute.xlu0 %1393
  %v1395 = vrot.slane %v1235, 1
  %v1396 = vrot.slane %v1305, 1
  %v1397 = vsel %vm828, %v1395, %v1396
  %v1398 = vrot.slane %v1236, 1
  %v1399 = vrot.slane %v1306, 1
  %v1400 = vsel %vm828, %v1398, %v1399
  %1401 = vrot.lane.b32.xlu0 %v837, 32
  %v1402 = vpop.permute.xlu0 %1401
  %1403 = vrot.lane.b32.xlu0 %v840, 32
  %v1404 = vpop.permute.xlu0 %1403
  %1405 = vrot.lane.b32.xlu0 %v843, 32
  %v1406 = vpop.permute.xlu0 %1405
  %1407 = vrot.lane.b32.xlu0 %v846, 32
  %v1408 = vpop.permute.xlu0 %1407
  %1409 = vrot.lane.b32.xlu0 %v849, 32
  %v1410 = vpop.permute.xlu0 %1409
  %1411 = vrot.lane.b32.xlu0 %v852, 32
  %v1412 = vpop.permute.xlu0 %1411
  %1413 = vrot.lane.b32.xlu0 %v855, 32
  %v1414 = vpop.permute.xlu0 %1413
  %1415 = vrot.lane.b32.xlu0 %v858, 32
  %v1416 = vpop.permute.xlu0 %1415
  %1417 = vrot.lane.b32.xlu0 %v861, 32
  %v1418 = vpop.permute.xlu0 %1417
  %1419 = vrot.lane.b32.xlu0 %v864, 32
  %v1420 = vpop.permute.xlu0 %1419
  %1421 = vrot.lane.b32.xlu0 %v867, 32
  %v1422 = vpop.permute.xlu0 %1421
  %1423 = vrot.lane.b32.xlu0 %v870, 32
  %v1424 = vpop.permute.xlu0 %1423
  %1425 = vrot.lane.b32.xlu0 %v873, 32
  %v1426 = vpop.permute.xlu0 %1425
  %1427 = vrot.lane.b32.xlu0 %v876, 32
  %v1428 = vpop.permute.xlu0 %1427
  %1429 = vrot.lane.b32.xlu0 %v1159, 32
  %v1430 = vpop.permute.xlu0 %1429
  %1431 = vrot.lane.b32.xlu0 %v1397, 32
  %v1432 = vpop.permute.xlu0 %1431
  %1433 = vrot.lane.b32.xlu0 %v885, 32
  %v1434 = vpop.permute.xlu0 %1433
  %1435 = vrot.lane.b32.xlu0 %v888, 32
  %v1436 = vpop.permute.xlu0 %1435
  %1437 = vrot.lane.b32.xlu0 %v891, 32
  %v1438 = vpop.permute.xlu0 %1437
  %1439 = vrot.lane.b32.xlu0 %v894, 32
  %v1440 = vpop.permute.xlu0 %1439
  %1441 = vrot.lane.b32.xlu0 %v897, 32
  %v1442 = vpop.permute.xlu0 %1441
  %1443 = vrot.lane.b32.xlu0 %v900, 32
  %v1444 = vpop.permute.xlu0 %1443
  %1445 = vrot.lane.b32.xlu0 %v903, 32
  %v1446 = vpop.permute.xlu0 %1445
  %1447 = vrot.lane.b32.xlu0 %v906, 32
  %v1448 = vpop.permute.xlu0 %1447
  %1449 = vrot.lane.b32.xlu0 %v909, 32
  %v1450 = vpop.permute.xlu0 %1449
  %1451 = vrot.lane.b32.xlu0 %v912, 32
  %v1452 = vpop.permute.xlu0 %1451
  %1453 = vrot.lane.b32.xlu0 %v915, 32
  %v1454 = vpop.permute.xlu0 %1453
  %1455 = vrot.lane.b32.xlu0 %v918, 32
  %v1456 = vpop.permute.xlu0 %1455
  %1457 = vrot.lane.b32.xlu0 %v921, 32
  %v1458 = vpop.permute.xlu0 %1457
  %1459 = vrot.lane.b32.xlu0 %v924, 32
  %v1460 = vpop.permute.xlu0 %1459
  %1461 = vrot.lane.b32.xlu0 %v1162, 32
  %v1462 = vpop.permute.xlu0 %1461
  %1463 = vrot.lane.b32.xlu0 %v1400, 32
  %v1464 = vpop.permute.xlu0 %1463
  %vm1465 = vcmask 31744
  %v1467 = vsel %vm1465, %v251, %v765
  %v1469 = vsel %vm1465, %v252, %v767
  %v1471 = vsel %vm1465, %v253, %v769
  %v1473 = vsel %vm1465, %v254, %v771
  %v1475 = vsel %vm1465, %v255, %v773
  %v1477 = vsel %vm1465, %v256, %v775
  %v1479 = vsel %vm1465, %v257, %v777
  %v1481 = vsel %vm1465, %v258, %v779
  %v1483 = vsel %vm1465, %v259, %v781
  %v1485 = vsel %vm1465, %v260, %v783
  %v1487 = vsel %vm1465, %v261, %v785
  %v1489 = vsel %vm1465, %v262, %v787
  %v1491 = vsel %vm1465, %v263, %v789
  %v1493 = vsel %vm1465, %v264, %v791
  %v1495 = vsel %vm1465, %v265, %v793
  %v1497 = vsel %vm1465, %v266, %v795
  %v1499 = vsel %vm1465, %v267, %v797
  %v1501 = vsel %vm1465, %v268, %v799
  %v1503 = vsel %vm1465, %v269, %v801
  %v1505 = vsel %vm1465, %v270, %v803
  %v1507 = vsel %vm1465, %v271, %v805
  %v1509 = vsel %vm1465, %v272, %v807
  %v1511 = vsel %vm1465, %v273, %v809
  %v1513 = vsel %vm1465, %v274, %v811
  %v1515 = vsel %vm1465, %v275, %v813
  %v1517 = vsel %vm1465, %v276, %v815
  %v1519 = vsel %vm1465, %v277, %v817
  %v1521 = vsel %vm1465, %v278, %v819
  %v1523 = vsel %vm1465, %v279, %v821
  %v1525 = vsel %vm1465, %v280, %v823
  %v1527 = vsel %vm1465, %v281, %v825
  %v1529 = vsel %vm1465, %v282, %v827
  %vm1530 = vcmask 64512
  %v1532 = vsel %vm1530, %v1467, %v926
  %v1534 = vsel %vm1530, %v1469, %v928
  %v1536 = vsel %vm1530, %v1471, %v930
  %v1538 = vsel %vm1530, %v1473, %v932
  %v1540 = vsel %vm1530, %v1475, %v934
  %v1542 = vsel %vm1530, %v1477, %v936
  %v1544 = vsel %vm1530, %v1479, %v938
  %v1546 = vsel %vm1530, %v1481, %v940
  %v1548 = vsel %vm1530, %v1483, %v942
  %v1550 = vsel %vm1530, %v1485, %v944
  %v1552 = vsel %vm1530, %v1487, %v946
  %v1554 = vsel %vm1530, %v1489, %v948
  %v1556 = vsel %vm1530, %v1491, %v950
  %v1558 = vsel %vm1530, %v1493, %v952
  %v1560 = vsel %vm1530, %v1495, %v954
  %v1562 = vsel %vm1530, %v1497, %v956
  %v1564 = vsel %vm1530, %v1499, %v958
  %v1566 = vsel %vm1530, %v1501, %v960
  %v1568 = vsel %vm1530, %v1503, %v962
  %v1570 = vsel %vm1530, %v1505, %v964
  %v1572 = vsel %vm1530, %v1507, %v966
  %v1574 = vsel %vm1530, %v1509, %v968
  %v1576 = vsel %vm1530, %v1511, %v970
  %v1578 = vsel %vm1530, %v1513, %v972
  %v1580 = vsel %vm1530, %v1515, %v974
  %v1582 = vsel %vm1530, %v1517, %v976
  %v1584 = vsel %vm1530, %v1519, %v978
  %v1586 = vsel %vm1530, %v1521, %v980
  %v1588 = vsel %vm1530, %v1523, %v982
  %v1590 = vsel %vm1530, %v1525, %v984
  %v1592 = vsel %vm1530, %v1527, %v986
  %v1594 = vsel %vm1530, %v1529, %v988
  %vm1595 = vcmask 97280
  %v1597 = vsel %vm1595, %v1532, %v1000
  %v1599 = vsel %vm1595, %v1534, %v1002
  %v1601 = vsel %vm1595, %v1536, %v1004
  %v1603 = vsel %vm1595, %v1538, %v1006
  %v1605 = vsel %vm1595, %v1540, %v1008
  %v1607 = vsel %vm1595, %v1542, %v1010
  %v1609 = vsel %vm1595, %v1544, %v1012
  %v1611 = vsel %vm1595, %v1546, %v1014
  %v1613 = vsel %vm1595, %v1548, %v1016
  %v1615 = vsel %vm1595, %v1550, %v1018
  %v1617 = vsel %vm1595, %v1552, %v1020
  %v1619 = vsel %vm1595, %v1554, %v1022
  %v1621 = vsel %vm1595, %v1556, %v1024
  %v1623 = vsel %vm1595, %v1558, %v1026
  %v1625 = vsel %vm1595, %v1560, %v1028
  %v1627 = vsel %vm1595, %v1562, %v1030
  %v1629 = vsel %vm1595, %v1564, %v1032
  %v1631 = vsel %vm1595, %v1566, %v1034
  %v1633 = vsel %vm1595, %v1568, %v1036
  %v1635 = vsel %vm1595, %v1570, %v1038
  %v1637 = vsel %vm1595, %v1572, %v1040
  %v1639 = vsel %vm1595, %v1574, %v1042
  %v1641 = vsel %vm1595, %v1576, %v1044
  %v1643 = vsel %vm1595, %v1578, %v1046
  %v1645 = vsel %vm1595, %v1580, %v1048
  %v1647 = vsel %vm1595, %v1582, %v1050
  %v1649 = vsel %vm1595, %v1584, %v1052
  %v1651 = vsel %vm1595, %v1586, %v1054
  %v1653 = vsel %vm1595, %v1588, %v1056
  %v1655 = vsel %vm1595, %v1590, %v1058
  %v1657 = vsel %vm1595, %v1592, %v1060
  %v1659 = vsel %vm1595, %v1594, %v1062
  %vm1660 = vcmask 130048
  %v1662 = vsel %vm1660, %v1597, %v1094
  %v1664 = vsel %vm1660, %v1599, %v1096
  %v1666 = vsel %vm1660, %v1601, %v1098
  %v1668 = vsel %vm1660, %v1603, %v1100
  %v1670 = vsel %vm1660, %v1605, %v1102
  %v1672 = vsel %vm1660, %v1607, %v1104
  %v1674 = vsel %vm1660, %v1609, %v1106
  %v1676 = vsel %vm1660, %v1611, %v1108
  %v1678 = vsel %vm1660, %v1613, %v1110
  %v1680 = vsel %vm1660, %v1615, %v1112
  %v1682 = vsel %vm1660, %v1617, %v1114
  %v1684 = vsel %vm1660, %v1619, %v1116
  %v1686 = vsel %vm1660, %v1621, %v1118
  %v1688 = vsel %vm1660, %v1623, %v1120
  %v1690 = vsel %vm1660, %v1625, %v1122
  %v1692 = vsel %vm1660, %v1627, %v1124
  %v1694 = vsel %vm1660, %v1629, %v1126
  %v1696 = vsel %vm1660, %v1631, %v1128
  %v1698 = vsel %vm1660, %v1633, %v1130
  %v1700 = vsel %vm1660, %v1635, %v1132
  %v1702 = vsel %vm1660, %v1637, %v1134
  %v1704 = vsel %vm1660, %v1639, %v1136
  %v1706 = vsel %vm1660, %v1641, %v1138
  %v1708 = vsel %vm1660, %v1643, %v1140
  %v1710 = vsel %vm1660, %v1645, %v1142
  %v1712 = vsel %vm1660, %v1647, %v1144
  %v1714 = vsel %vm1660, %v1649, %v1146
  %v1716 = vsel %vm1660, %v1651, %v1148
  %v1718 = vsel %vm1660, %v1653, %v1150
  %v1720 = vsel %vm1660, %v1655, %v1152
  %v1722 = vsel %vm1660, %v1657, %v1154
  %v1724 = vsel %vm1660, %v1659, %v1156
  %vm1725 = vcmask 162816
  %v1727 = vsel %vm1725, %v1662, %v1164
  %v1729 = vsel %vm1725, %v1664, %v1166
  %v1731 = vsel %vm1725, %v1666, %v1168
  %v1733 = vsel %vm1725, %v1668, %v1170
  %v1735 = vsel %vm1725, %v1670, %v1172
  %v1737 = vsel %vm1725, %v1672, %v1174
  %v1739 = vsel %vm1725, %v1674, %v1176
  %v1741 = vsel %vm1725, %v1676, %v1178
  %v1743 = vsel %vm1725, %v1678, %v1180
  %v1745 = vsel %vm1725, %v1680, %v1182
  %v1747 = vsel %vm1725, %v1682, %v1184
  %v1749 = vsel %vm1725, %v1684, %v1186
  %v1751 = vsel %vm1725, %v1686, %v1188
  %v1753 = vsel %vm1725, %v1688, %v1190
  %v1755 = vsel %vm1725, %v1690, %v1192
  %v1757 = vsel %vm1725, %v1692, %v1194
  %v1759 = vsel %vm1725, %v1694, %v1196
  %v1761 = vsel %vm1725, %v1696, %v1198
  %v1763 = vsel %vm1725, %v1698, %v1200
  %v1765 = vsel %vm1725, %v1700, %v1202
  %v1767 = vsel %vm1725, %v1702, %v1204
  %v1769 = vsel %vm1725, %v1704, %v1206
  %v1771 = vsel %vm1725, %v1706, %v1208
  %v1773 = vsel %vm1725, %v1708, %v1210
  %v1775 = vsel %vm1725, %v1710, %v1212
  %v1777 = vsel %vm1725, %v1712, %v1214
  %v1779 = vsel %vm1725, %v1714, %v1216
  %v1781 = vsel %vm1725, %v1716, %v1218
  %v1783 = vsel %vm1725, %v1718, %v1220
  %v1785 = vsel %vm1725, %v1720, %v1222
  %v1787 = vsel %vm1725, %v1722, %v1224
  %v1789 = vsel %vm1725, %v1724, %v1226
  %vm1790 = vcmask 195584
  %v1792 = vsel %vm1790, %v1727, %v1238
  %v1794 = vsel %vm1790, %v1729, %v1240
  %v1796 = vsel %vm1790, %v1731, %v1242
  %v1798 = vsel %vm1790, %v1733, %v1244
  %v1800 = vsel %vm1790, %v1735, %v1246
  %v1802 = vsel %vm1790, %v1737, %v1248
  %v1804 = vsel %vm1790, %v1739, %v1250
  %v1806 = vsel %vm1790, %v1741, %v1252
  %v1808 = vsel %vm1790, %v1743, %v1254
  %v1810 = vsel %vm1790, %v1745, %v1256
  %v1812 = vsel %vm1790, %v1747, %v1258
  %v1814 = vsel %vm1790, %v1749, %v1260
  %v1816 = vsel %vm1790, %v1751, %v1262
  %v1818 = vsel %vm1790, %v1753, %v1264
  %v1820 = vsel %vm1790, %v1755, %v1266
  %v1822 = vsel %vm1790, %v1757, %v1268
  %v1824 = vsel %vm1790, %v1759, %v1270
  %v1826 = vsel %vm1790, %v1761, %v1272
  %v1828 = vsel %vm1790, %v1763, %v1274
  %v1830 = vsel %vm1790, %v1765, %v1276
  %v1832 = vsel %vm1790, %v1767, %v1278
  %v1834 = vsel %vm1790, %v1769, %v1280
  %v1836 = vsel %vm1790, %v1771, %v1282
  %v1838 = vsel %vm1790, %v1773, %v1284
  %v1840 = vsel %vm1790, %v1775, %v1286
  %v1842 = vsel %vm1790, %v1777, %v1288
  %v1844 = vsel %vm1790, %v1779, %v1290
  %v1846 = vsel %vm1790, %v1781, %v1292
  %v1848 = vsel %vm1790, %v1783, %v1294
  %v1850 = vsel %vm1790, %v1785, %v1296
  %v1852 = vsel %vm1790, %v1787, %v1298
  %v1854 = vsel %vm1790, %v1789, %v1300
  %vm1855 = vcmask 228352
  %v1857 = vsel %vm1855, %v1792, %v1332
  %v1859 = vsel %vm1855, %v1794, %v1334
  %v1861 = vsel %vm1855, %v1796, %v1336
  %v1863 = vsel %vm1855, %v1798, %v1338
  %v1865 = vsel %vm1855, %v1800, %v1340
  %v1867 = vsel %vm1855, %v1802, %v1342
  %v1869 = vsel %vm1855, %v1804, %v1344
  %v1871 = vsel %vm1855, %v1806, %v1346
  %v1873 = vsel %vm1855, %v1808, %v1348
  %v1875 = vsel %vm1855, %v1810, %v1350
  %v1877 = vsel %vm1855, %v1812, %v1352
  %v1879 = vsel %vm1855, %v1814, %v1354
  %v1881 = vsel %vm1855, %v1816, %v1356
  %v1883 = vsel %vm1855, %v1818, %v1358
  %v1885 = vsel %vm1855, %v1820, %v1360
  %v1887 = vsel %vm1855, %v1822, %v1362
  %v1889 = vsel %vm1855, %v1824, %v1364
  %v1891 = vsel %vm1855, %v1826, %v1366
  %v1893 = vsel %vm1855, %v1828, %v1368
  %v1895 = vsel %vm1855, %v1830, %v1370
  %v1897 = vsel %vm1855, %v1832, %v1372
  %v1899 = vsel %vm1855, %v1834, %v1374
  %v1901 = vsel %vm1855, %v1836, %v1376
  %v1903 = vsel %vm1855, %v1838, %v1378
  %v1905 = vsel %vm1855, %v1840, %v1380
  %v1907 = vsel %vm1855, %v1842, %v1382
  %v1909 = vsel %vm1855, %v1844, %v1384
  %v1911 = vsel %vm1855, %v1846, %v1386
  %v1913 = vsel %vm1855, %v1848, %v1388
  %v1915 = vsel %vm1855, %v1850, %v1390
  %v1917 = vsel %vm1855, %v1852, %v1392
  %v1919 = vsel %vm1855, %v1854, %v1394
  %vm1920 = vcmask 261120
  %v1922 = vsel %vm1920, %v1857, %v1402
  %v1924 = vsel %vm1920, %v1859, %v1404
  %v1926 = vsel %vm1920, %v1861, %v1406
  %v1928 = vsel %vm1920, %v1863, %v1408
  %v1930 = vsel %vm1920, %v1865, %v1410
  %v1932 = vsel %vm1920, %v1867, %v1412
  %v1934 = vsel %vm1920, %v1869, %v1414
  %v1936 = vsel %vm1920, %v1871, %v1416
  %v1938 = vsel %vm1920, %v1873, %v1418
  %v1940 = vsel %vm1920, %v1875, %v1420
  %v1942 = vsel %vm1920, %v1877, %v1422
  %v1944 = vsel %vm1920, %v1879, %v1424
  %v1946 = vsel %vm1920, %v1881, %v1426
  %v1948 = vsel %vm1920, %v1883, %v1428
  %v1950 = vsel %vm1920, %v1885, %v1430
  %v1952 = vsel %vm1920, %v1887, %v1432
  %v1954 = vsel %vm1920, %v1889, %v1434
  %v1956 = vsel %vm1920, %v1891, %v1436
  %v1958 = vsel %vm1920, %v1893, %v1438
  %v1960 = vsel %vm1920, %v1895, %v1440
  %v1962 = vsel %vm1920, %v1897, %v1442
  %v1964 = vsel %vm1920, %v1899, %v1444
  %v1966 = vsel %vm1920, %v1901, %v1446
  %v1968 = vsel %vm1920, %v1903, %v1448
  %v1970 = vsel %vm1920, %v1905, %v1450
  %v1972 = vsel %vm1920, %v1907, %v1452
  %v1974 = vsel %vm1920, %v1909, %v1454
  %v1976 = vsel %vm1920, %v1911, %v1456
  %v1978 = vsel %vm1920, %v1913, %v1458
  %v1980 = vsel %vm1920, %v1915, %v1460
  %v1982 = vsel %vm1920, %v1917, %v1462
  %v1984 = vsel %vm1920, %v1919, %v1464
  %v1985 = vld [vmem:[%s1] sm:$0xf]
  %v1986 = vld [vmem:[%s1 + $0x4] sm:$0xf]
  %v1987 = vld [vmem:[%s1 + $0x8] sm:$0xf]
  %v1988 = vld [vmem:[%s1 + $0xc] sm:$0xf]
  %v1989 = vld [vmem:[%s1 + $0x10] sm:$0x3]
  %v1990 = vld [vmem:[%s2] sm:$0x1]
  %v1992 = vperm.slane %v1990, 0
  %v1999 = vunpack.c.l.b16 %v1985
  %v2000 = vunpack.c.l.b16 %v1986
  %v2001 = vunpack.c.l.b16 %v1987
  %v2002 = vunpack.c.l.b16 %v1988
  %v2003 = vunpack.c.l.b16 %v1989
  %v2004 = vpack.c.b16 %v2000, %v1999
  %v2005 = vpack.c.b16 %v2002, %v2001
  %v2006 = vpack.c.b16 %v2003, %v2003
  %vm2009 = vcmask 293888
  %v2010 = vsel %vm2009, %v1922, 0
  %v2012 = vsel %vm2009, %v1924, 0
  %v2014 = vsel %vm2009, %v1926, 0
  %v2016 = vsel %vm2009, %v1928, 0
  %v2018 = vsel %vm2009, %v1930, 0
  %v2020 = vsel %vm2009, %v1932, 0
  %v2022 = vsel %vm2009, %v1934, 0
  %v2024 = vsel %vm2009, %v1936, 0
  %v2026 = vsel %vm2009, %v1938, 0
  %v2028 = vsel %vm2009, %v1940, 0
  %v2030 = vsel %vm2009, %v1942, 0
  %v2032 = vsel %vm2009, %v1944, 0
  %v2034 = vsel %vm2009, %v1946, 0
  %v2036 = vsel %vm2009, %v1948, 0
  %v2038 = vsel %vm2009, %v1950, 0
  %v2040 = vsel %vm2009, %v1952, 0
  %v2042 = vsel %vm2009, %v1954, 0
  %v2044 = vsel %vm2009, %v1956, 0
  %v2046 = vsel %vm2009, %v1958, 0
  %v2048 = vsel %vm2009, %v1960, 0
  %v2050 = vsel %vm2009, %v1962, 0
  %v2052 = vsel %vm2009, %v1964, 0
  %v2054 = vsel %vm2009, %v1966, 0
  %v2056 = vsel %vm2009, %v1968, 0
  %v2058 = vsel %vm2009, %v1970, 0
  %v2060 = vsel %vm2009, %v1972, 0
  %v2062 = vsel %vm2009, %v1974, 0
  %v2064 = vsel %vm2009, %v1976, 0
  %v2066 = vsel %vm2009, %v1978, 0
  %v2068 = vsel %vm2009, %v1980, 0
  %v2070 = vsel %vm2009, %v1982, 0
  %v2072 = vsel %vm2009, %v1984, 0
  %vm2074 = vcmask 1041408
  %v2076 = vsel %vm2074, %v2006, 0
  %2078 = vmatpush.bf16.msra.mxu0 0
  %2079 = vmatpush.bf16.msra.mxu0 0
  %2080 = vmatpush.bf16.msra.mxu0 0
  %2081 = vmatpush.bf16.msra.mxu0 0
  %2082 = vmatpush.bf16.msra.mxu0 0
  %2083 = vmatpush.bf16.msra.mxu0 %v2076
  %2084 = vmatpush.bf16.msra.mxu0 %v2005
  %2085 = vmatpush.bf16.msra.mxu0 %v2004
  %2086 = vmatmul.bf16.gmra.mxu0 %v2010
  %v2087 = vpop.f32.mrf.mxu0
  %v2088 = vadd.f32 %v1992, %v2087
  %v2089 = vpop.f32.mrf.mxu0
  %v2090 = vadd.f32 %v1992, %v2089
  %2091 = vmatmul.bf16.gmra.mxu0 %v2012
  %v2092 = vpop.f32.mrf.mxu0
  %v2093 = vadd.f32 %v1992, %v2092
  %v2094 = vpop.f32.mrf.mxu0
  %v2095 = vadd.f32 %v1992, %v2094
  %2096 = vmatmul.bf16.gmra.mxu0 %v2014
  %v2097 = vpop.f32.mrf.mxu0
  %v2098 = vadd.f32 %v1992, %v2097
  %v2099 = vpop.f32.mrf.mxu0
  %v2100 = vadd.f32 %v1992, %v2099
  %2101 = vmatmul.bf16.gmra.mxu0 %v2016
  %v2102 = vpop.f32.mrf.mxu0
  %v2103 = vadd.f32 %v1992, %v2102
  %v2104 = vpop.f32.mrf.mxu0
  %v2105 = vadd.f32 %v1992, %v2104
  %2106 = vmatmul.bf16.gmra.mxu0 %v2018
  %v2107 = vpop.f32.mrf.mxu0
  %v2108 = vadd.f32 %v1992, %v2107
  %v2109 = vpop.f32.mrf.mxu0
  %v2110 = vadd.f32 %v1992, %v2109
  %2111 = vmatmul.bf16.gmra.mxu0 %v2020
  %v2112 = vpop.f32.mrf.mxu0
  %v2113 = vadd.f32 %v1992, %v2112
  %v2114 = vpop.f32.mrf.mxu0
  %v2115 = vadd.f32 %v1992, %v2114
  %2116 = vmatmul.bf16.gmra.mxu0 %v2022
  %v2117 = vpop.f32.mrf.mxu0
  %v2118 = vadd.f32 %v1992, %v2117
  %v2119 = vpop.f32.mrf.mxu0
  %v2120 = vadd.f32 %v1992, %v2119
  %2121 = vmatmul.bf16.gmra.mxu0 %v2024
  %v2122 = vpop.f32.mrf.mxu0
  %v2123 = vadd.f32 %v1992, %v2122
  %v2124 = vpop.f32.mrf.mxu0
  %v2125 = vadd.f32 %v1992, %v2124
  %2126 = vmatmul.bf16.gmra.mxu0 %v2026
  %v2127 = vpop.f32.mrf.mxu0
  %v2128 = vadd.f32 %v1992, %v2127
  %v2129 = vpop.f32.mrf.mxu0
  %v2130 = vadd.f32 %v1992, %v2129
  %2131 = vmatmul.bf16.gmra.mxu0 %v2028
  %v2132 = vpop.f32.mrf.mxu0
  %v2133 = vadd.f32 %v1992, %v2132
  %v2134 = vpop.f32.mrf.mxu0
  %v2135 = vadd.f32 %v1992, %v2134
  %2136 = vmatmul.bf16.gmra.mxu0 %v2030
  %v2137 = vpop.f32.mrf.mxu0
  %v2138 = vadd.f32 %v1992, %v2137
  %v2139 = vpop.f32.mrf.mxu0
  %v2140 = vadd.f32 %v1992, %v2139
  %2141 = vmatmul.bf16.gmra.mxu0 %v2032
  %v2142 = vpop.f32.mrf.mxu0
  %v2143 = vadd.f32 %v1992, %v2142
  %v2144 = vpop.f32.mrf.mxu0
  %v2145 = vadd.f32 %v1992, %v2144
  %2146 = vmatmul.bf16.gmra.mxu0 %v2034
  %v2147 = vpop.f32.mrf.mxu0
  %v2148 = vadd.f32 %v1992, %v2147
  %v2149 = vpop.f32.mrf.mxu0
  %v2150 = vadd.f32 %v1992, %v2149
  %2151 = vmatmul.bf16.gmra.mxu0 %v2036
  %v2152 = vpop.f32.mrf.mxu0
  %v2153 = vadd.f32 %v1992, %v2152
  %v2154 = vpop.f32.mrf.mxu0
  %v2155 = vadd.f32 %v1992, %v2154
  %2156 = vmatmul.bf16.gmra.mxu0 %v2038
  %v2157 = vpop.f32.mrf.mxu0
  %v2158 = vadd.f32 %v1992, %v2157
  %v2159 = vpop.f32.mrf.mxu0
  %v2160 = vadd.f32 %v1992, %v2159
  %2161 = vmatmul.bf16.gmra.mxu0 %v2040
  %v2162 = vpop.f32.mrf.mxu0
  %v2163 = vadd.f32 %v1992, %v2162
  %v2164 = vpop.f32.mrf.mxu0
  %v2165 = vadd.f32 %v1992, %v2164
  %2166 = vmatmul.bf16.gmra.mxu0 %v2042
  %v2167 = vpop.f32.mrf.mxu0
  %v2168 = vadd.f32 %v1992, %v2167
  %v2169 = vpop.f32.mrf.mxu0
  %v2170 = vadd.f32 %v1992, %v2169
  %2171 = vmatmul.bf16.gmra.mxu0 %v2044
  %v2172 = vpop.f32.mrf.mxu0
  %v2173 = vadd.f32 %v1992, %v2172
  %v2174 = vpop.f32.mrf.mxu0
  %v2175 = vadd.f32 %v1992, %v2174
  %2176 = vmatmul.bf16.gmra.mxu0 %v2046
  %v2177 = vpop.f32.mrf.mxu0
  %v2178 = vadd.f32 %v1992, %v2177
  %v2179 = vpop.f32.mrf.mxu0
  %v2180 = vadd.f32 %v1992, %v2179
  %2181 = vmatmul.bf16.gmra.mxu0 %v2048
  %v2182 = vpop.f32.mrf.mxu0
  %v2183 = vadd.f32 %v1992, %v2182
  %v2184 = vpop.f32.mrf.mxu0
  %v2185 = vadd.f32 %v1992, %v2184
  %2186 = vmatmul.bf16.gmra.mxu0 %v2050
  %v2187 = vpop.f32.mrf.mxu0
  %v2188 = vadd.f32 %v1992, %v2187
  %v2189 = vpop.f32.mrf.mxu0
  %v2190 = vadd.f32 %v1992, %v2189
  %2191 = vmatmul.bf16.gmra.mxu0 %v2052
  %v2192 = vpop.f32.mrf.mxu0
  %v2193 = vadd.f32 %v1992, %v2192
  %v2194 = vpop.f32.mrf.mxu0
  %v2195 = vadd.f32 %v1992, %v2194
  %2196 = vmatmul.bf16.gmra.mxu0 %v2054
  %v2197 = vpop.f32.mrf.mxu0
  %v2198 = vadd.f32 %v1992, %v2197
  %v2199 = vpop.f32.mrf.mxu0
  %v2200 = vadd.f32 %v1992, %v2199
  %2201 = vmatmul.bf16.gmra.mxu0 %v2056
  %v2202 = vpop.f32.mrf.mxu0
  %v2203 = vadd.f32 %v1992, %v2202
  %v2204 = vpop.f32.mrf.mxu0
  %v2205 = vadd.f32 %v1992, %v2204
  %2206 = vmatmul.bf16.gmra.mxu0 %v2058
  %v2207 = vpop.f32.mrf.mxu0
  %v2208 = vadd.f32 %v1992, %v2207
  %v2209 = vpop.f32.mrf.mxu0
  %v2210 = vadd.f32 %v1992, %v2209
  %2211 = vmatmul.bf16.gmra.mxu0 %v2060
  %v2212 = vpop.f32.mrf.mxu0
  %v2213 = vadd.f32 %v1992, %v2212
  %v2214 = vpop.f32.mrf.mxu0
  %v2215 = vadd.f32 %v1992, %v2214
  %2216 = vmatmul.bf16.gmra.mxu0 %v2062
  %v2217 = vpop.f32.mrf.mxu0
  %v2218 = vadd.f32 %v1992, %v2217
  %v2219 = vpop.f32.mrf.mxu0
  %v2220 = vadd.f32 %v1992, %v2219
  %2221 = vmatmul.bf16.gmra.mxu0 %v2064
  %v2222 = vpop.f32.mrf.mxu0
  %v2223 = vadd.f32 %v1992, %v2222
  %v2224 = vpop.f32.mrf.mxu0
  %v2225 = vadd.f32 %v1992, %v2224
  %2226 = vmatmul.bf16.gmra.mxu0 %v2066
  %v2227 = vpop.f32.mrf.mxu0
  %v2228 = vadd.f32 %v1992, %v2227
  %v2229 = vpop.f32.mrf.mxu0
  %v2230 = vadd.f32 %v1992, %v2229
  %2231 = vmatmul.bf16.gmra.mxu0 %v2068
  %v2232 = vpop.f32.mrf.mxu0
  %v2233 = vadd.f32 %v1992, %v2232
  %v2234 = vpop.f32.mrf.mxu0
  %v2235 = vadd.f32 %v1992, %v2234
  %2236 = vmatmul.bf16.gmra.mxu0 %v2070
  %v2237 = vpop.f32.mrf.mxu0
  %v2238 = vadd.f32 %v1992, %v2237
  %v2239 = vpop.f32.mrf.mxu0
  %v2240 = vadd.f32 %v1992, %v2239
  %2241 = vmatmul.bf16.gmra.mxu0 %v2072
  %v2242 = vpop.f32.mrf.mxu0
  %v2243 = vadd.f32 %v1992, %v2242
  %v2244 = vpop.f32.mrf.mxu0
  %v2245 = vadd.f32 %v1992, %v2244
  %2246 = vdwg.mxu0
  %v2247 = vsub.f32 0.0, %v2088
  %v2248 = vsub.f32 0.0, %v2090
  %v2249 = vsub.f32 0.0, %v2093
  %v2250 = vsub.f32 0.0, %v2095
  %v2251 = vsub.f32 0.0, %v2098
  %v2252 = vsub.f32 0.0, %v2100
  %v2253 = vsub.f32 0.0, %v2103
  %v2254 = vsub.f32 0.0, %v2105
  %v2255 = vsub.f32 0.0, %v2108
  %v2256 = vsub.f32 0.0, %v2110
  %v2257 = vsub.f32 0.0, %v2113
  %v2258 = vsub.f32 0.0, %v2115
  %v2259 = vsub.f32 0.0, %v2118
  %v2260 = vsub.f32 0.0, %v2120
  %v2261 = vsub.f32 0.0, %v2123
  %v2262 = vsub.f32 0.0, %v2125
  %v2263 = vsub.f32 0.0, %v2128
  %v2264 = vsub.f32 0.0, %v2130
  %v2265 = vsub.f32 0.0, %v2133
  %v2266 = vsub.f32 0.0, %v2135
  %v2267 = vsub.f32 0.0, %v2138
  %v2268 = vsub.f32 0.0, %v2140
  %v2269 = vsub.f32 0.0, %v2143
  %v2270 = vsub.f32 0.0, %v2145
  %v2271 = vsub.f32 0.0, %v2148
  %v2272 = vsub.f32 0.0, %v2150
  %v2273 = vsub.f32 0.0, %v2153
  %v2274 = vsub.f32 0.0, %v2155
  %v2275 = vsub.f32 0.0, %v2158
  %v2276 = vsub.f32 0.0, %v2160
  %v2277 = vsub.f32 0.0, %v2163
  %v2278 = vsub.f32 0.0, %v2165
  %v2279 = vsub.f32 0.0, %v2168
  %v2280 = vsub.f32 0.0, %v2170
  %v2281 = vsub.f32 0.0, %v2173
  %v2282 = vsub.f32 0.0, %v2175
  %v2283 = vsub.f32 0.0, %v2178
  %v2284 = vsub.f32 0.0, %v2180
  %v2285 = vsub.f32 0.0, %v2183
  %v2286 = vsub.f32 0.0, %v2185
  %v2287 = vsub.f32 0.0, %v2188
  %v2288 = vsub.f32 0.0, %v2190
  %v2289 = vsub.f32 0.0, %v2193
  %v2290 = vsub.f32 0.0, %v2195
  %v2291 = vsub.f32 0.0, %v2198
  %v2292 = vsub.f32 0.0, %v2200
  %v2293 = vsub.f32 0.0, %v2203
  %v2294 = vsub.f32 0.0, %v2205
  %v2295 = vsub.f32 0.0, %v2208
  %v2296 = vsub.f32 0.0, %v2210
  %v2297 = vsub.f32 0.0, %v2213
  %v2298 = vsub.f32 0.0, %v2215
  %v2299 = vsub.f32 0.0, %v2218
  %v2300 = vsub.f32 0.0, %v2220
  %v2301 = vsub.f32 0.0, %v2223
  %v2302 = vsub.f32 0.0, %v2225
  %v2303 = vsub.f32 0.0, %v2228
  %v2304 = vsub.f32 0.0, %v2230
  %v2305 = vsub.f32 0.0, %v2233
  %v2306 = vsub.f32 0.0, %v2235
  %v2307 = vsub.f32 0.0, %v2238
  %v2308 = vsub.f32 0.0, %v2240
  %v2309 = vsub.f32 0.0, %v2243
  %v2310 = vsub.f32 0.0, %v2245
  %v2311 = vmul.f32 %v2247, 1.442695
  %v2312 = vpow.pop %v2311
  %v2313 = vmul.f32 %v2248, 1.442695
  %v2314 = vpow.pop %v2313
  %v2315 = vmul.f32 %v2249, 1.442695
  %v2316 = vpow.pop %v2315
  %v2317 = vmul.f32 %v2250, 1.442695
  %v2318 = vpow.pop %v2317
  %v2319 = vmul.f32 %v2251, 1.442695
  %v2320 = vpow.pop %v2319
  %v2321 = vmul.f32 %v2252, 1.442695
  %v2322 = vpow.pop %v2321
  %v2323 = vmul.f32 %v2253, 1.442695
  %v2324 = vpow.pop %v2323
  %v2325 = vmul.f32 %v2254, 1.442695
  %v2326 = vpow.pop %v2325
  %v2327 = vmul.f32 %v2255, 1.442695
  %v2328 = vpow.pop %v2327
  %v2329 = vmul.f32 %v2256, 1.442695
  %v2330 = vpow.pop %v2329
  %v2331 = vmul.f32 %v2257, 1.442695
  %v2332 = vpow.pop %v2331
  %v2333 = vmul.f32 %v2258, 1.442695
  %v2334 = vpow.pop %v2333
  %v2335 = vmul.f32 %v2259, 1.442695
  %v2336 = vpow.pop %v2335
  %v2337 = vmul.f32 %v2260, 1.442695
  %v2338 = vpow.pop %v2337
  %v2339 = vmul.f32 %v2261, 1.442695
  %v2340 = vpow.pop %v2339
  %v2341 = vmul.f32 %v2262, 1.442695
  %v2342 = vpow.pop %v2341
  %v2343 = vmul.f32 %v2263, 1.442695
  %v2344 = vpow.pop %v2343
  %v2345 = vmul.f32 %v2264, 1.442695
  %v2346 = vpow.pop %v2345
  %v2347 = vmul.f32 %v2265, 1.442695
  %v2348 = vpow.pop %v2347
  %v2349 = vmul.f32 %v2266, 1.442695
  %v2350 = vpow.pop %v2349
  %v2351 = vmul.f32 %v2267, 1.442695
  %v2352 = vpow.pop %v2351
  %v2353 = vmul.f32 %v2268, 1.442695
  %v2354 = vpow.pop %v2353
  %v2355 = vmul.f32 %v2269, 1.442695
  %v2356 = vpow.pop %v2355
  %v2357 = vmul.f32 %v2270, 1.442695
  %v2358 = vpow.pop %v2357
  %v2359 = vmul.f32 %v2271, 1.442695
  %v2360 = vpow.pop %v2359
  %v2361 = vmul.f32 %v2272, 1.442695
  %v2362 = vpow.pop %v2361
  %v2363 = vmul.f32 %v2273, 1.442695
  %v2364 = vpow.pop %v2363
  %v2365 = vmul.f32 %v2274, 1.442695
  %v2366 = vpow.pop %v2365
  %v2367 = vmul.f32 %v2275, 1.442695
  %v2368 = vpow.pop %v2367
  %v2369 = vmul.f32 %v2276, 1.442695
  %v2370 = vpow.pop %v2369
  %v2371 = vmul.f32 %v2277, 1.442695
  %v2372 = vpow.pop %v2371
  %v2373 = vmul.f32 %v2278, 1.442695
  %v2374 = vpow.pop %v2373
  %v2375 = vmul.f32 %v2279, 1.442695
  %v2376 = vpow.pop %v2375
  %v2377 = vmul.f32 %v2280, 1.442695
  %v2378 = vpow.pop %v2377
  %v2379 = vmul.f32 %v2281, 1.442695
  %v2380 = vpow.pop %v2379
  %v2381 = vmul.f32 %v2282, 1.442695
  %v2382 = vpow.pop %v2381
  %v2383 = vmul.f32 %v2283, 1.442695
  %v2384 = vpow.pop %v2383
  %v2385 = vmul.f32 %v2284, 1.442695
  %v2386 = vpow.pop %v2385
  %v2387 = vmul.f32 %v2285, 1.442695
  %v2388 = vpow.pop %v2387
  %v2389 = vmul.f32 %v2286, 1.442695
  %v2390 = vpow.pop %v2389
  %v2391 = vmul.f32 %v2287, 1.442695
  %v2392 = vpow.pop %v2391
  %v2393 = vmul.f32 %v2288, 1.442695
  %v2394 = vpow.pop %v2393
  %v2395 = vmul.f32 %v2289, 1.442695
  %v2396 = vpow.pop %v2395
  %v2397 = vmul.f32 %v2290, 1.442695
  %v2398 = vpow.pop %v2397
  %v2399 = vmul.f32 %v2291, 1.442695
  %v2400 = vpow.pop %v2399
  %v2401 = vmul.f32 %v2292, 1.442695
  %v2402 = vpow.pop %v2401
  %v2403 = vmul.f32 %v2293, 1.442695
  %v2404 = vpow.pop %v2403
  %v2405 = vmul.f32 %v2294, 1.442695
  %v2406 = vpow.pop %v2405
  %v2407 = vmul.f32 %v2295, 1.442695
  %v2408 = vpow.pop %v2407
  %v2409 = vmul.f32 %v2296, 1.442695
  %v2410 = vpow.pop %v2409
  %v2411 = vmul.f32 %v2297, 1.442695
  %v2412 = vpow.pop %v2411
  %v2413 = vmul.f32 %v2298, 1.442695
  %v2414 = vpow.pop %v2413
  %v2415 = vmul.f32 %v2299, 1.442695
  %v2416 = vpow.pop %v2415
  %v2417 = vmul.f32 %v2300, 1.442695
  %v2418 = vpow.pop %v2417
  %v2419 = vmul.f32 %v2301, 1.442695
  %v2420 = vpow.pop %v2419
  %v2421 = vmul.f32 %v2302, 1.442695
  %v2422 = vpow.pop %v2421
  %v2423 = vmul.f32 %v2303, 1.442695
  %v2424 = vpow.pop %v2423
  %v2425 = vmul.f32 %v2304, 1.442695
  %v2426 = vpow.pop %v2425
  %v2427 = vmul.f32 %v2305, 1.442695
  %v2428 = vpow.pop %v2427
  %v2429 = vmul.f32 %v2306, 1.442695
  %v2430 = vpow.pop %v2429
  %v2431 = vmul.f32 %v2307, 1.442695
  %v2432 = vpow.pop %v2431
  %v2433 = vmul.f32 %v2308, 1.442695
  %v2434 = vpow.pop %v2433
  %v2435 = vmul.f32 %v2309, 1.442695
  %v2436 = vpow.pop %v2435
  %v2437 = vmul.f32 %v2310, 1.442695
  %v2438 = vpow.pop %v2437
  %v2439 = vadd.f32 %v2312, 1.0
  %v2440 = vadd.f32 %v2314, 1.0
  %v2441 = vadd.f32 %v2316, 1.0
  %v2442 = vadd.f32 %v2318, 1.0
  %v2443 = vadd.f32 %v2320, 1.0
  %v2444 = vadd.f32 %v2322, 1.0
  %v2445 = vadd.f32 %v2324, 1.0
  %v2446 = vadd.f32 %v2326, 1.0
  %v2447 = vadd.f32 %v2328, 1.0
  %v2448 = vadd.f32 %v2330, 1.0
  %v2449 = vadd.f32 %v2332, 1.0
  %v2450 = vadd.f32 %v2334, 1.0
  %v2451 = vadd.f32 %v2336, 1.0
  %v2452 = vadd.f32 %v2338, 1.0
  %v2453 = vadd.f32 %v2340, 1.0
  %v2454 = vadd.f32 %v2342, 1.0
  %v2455 = vadd.f32 %v2344, 1.0
  %v2456 = vadd.f32 %v2346, 1.0
  %v2457 = vadd.f32 %v2348, 1.0
  %v2458 = vadd.f32 %v2350, 1.0
  %v2459 = vadd.f32 %v2352, 1.0
  %v2460 = vadd.f32 %v2354, 1.0
  %v2461 = vadd.f32 %v2356, 1.0
  %v2462 = vadd.f32 %v2358, 1.0
  %v2463 = vadd.f32 %v2360, 1.0
  %v2464 = vadd.f32 %v2362, 1.0
  %v2465 = vadd.f32 %v2364, 1.0
  %v2466 = vadd.f32 %v2366, 1.0
  %v2467 = vadd.f32 %v2368, 1.0
  %v2468 = vadd.f32 %v2370, 1.0
  %v2469 = vadd.f32 %v2372, 1.0
  %v2470 = vadd.f32 %v2374, 1.0
  %v2471 = vadd.f32 %v2376, 1.0
  %v2472 = vadd.f32 %v2378, 1.0
  %v2473 = vadd.f32 %v2380, 1.0
  %v2474 = vadd.f32 %v2382, 1.0
  %v2475 = vadd.f32 %v2384, 1.0
  %v2476 = vadd.f32 %v2386, 1.0
  %v2477 = vadd.f32 %v2388, 1.0
  %v2478 = vadd.f32 %v2390, 1.0
  %v2479 = vadd.f32 %v2392, 1.0
  %v2480 = vadd.f32 %v2394, 1.0
  %v2481 = vadd.f32 %v2396, 1.0
  %v2482 = vadd.f32 %v2398, 1.0
  %v2483 = vadd.f32 %v2400, 1.0
  %v2484 = vadd.f32 %v2402, 1.0
  %v2485 = vadd.f32 %v2404, 1.0
  %v2486 = vadd.f32 %v2406, 1.0
  %v2487 = vadd.f32 %v2408, 1.0
  %v2488 = vadd.f32 %v2410, 1.0
  %v2489 = vadd.f32 %v2412, 1.0
  %v2490 = vadd.f32 %v2414, 1.0
  %v2491 = vadd.f32 %v2416, 1.0
  %v2492 = vadd.f32 %v2418, 1.0
  %v2493 = vadd.f32 %v2420, 1.0
  %v2494 = vadd.f32 %v2422, 1.0
  %v2495 = vadd.f32 %v2424, 1.0
  %v2496 = vadd.f32 %v2426, 1.0
  %v2497 = vadd.f32 %v2428, 1.0
  %v2498 = vadd.f32 %v2430, 1.0
  %v2499 = vadd.f32 %v2432, 1.0
  %v2500 = vadd.f32 %v2434, 1.0
  %v2501 = vadd.f32 %v2436, 1.0
  %v2502 = vadd.f32 %v2438, 1.0
  %v2503 = vrcp.pop %v2439
  %v2504 = vrcp.pop %v2440
  %v2505 = vrcp.pop %v2441
  %v2506 = vrcp.pop %v2442
  %v2507 = vrcp.pop %v2443
  %v2508 = vrcp.pop %v2444
  %v2509 = vrcp.pop %v2445
  %v2510 = vrcp.pop %v2446
  %v2511 = vrcp.pop %v2447
  %v2512 = vrcp.pop %v2448
  %v2513 = vrcp.pop %v2449
  %v2514 = vrcp.pop %v2450
  %v2515 = vrcp.pop %v2451
  %v2516 = vrcp.pop %v2452
  %v2517 = vrcp.pop %v2453
  %v2518 = vrcp.pop %v2454
  %v2519 = vrcp.pop %v2455
  %v2520 = vrcp.pop %v2456
  %v2521 = vrcp.pop %v2457
  %v2522 = vrcp.pop %v2458
  %v2523 = vrcp.pop %v2459
  %v2524 = vrcp.pop %v2460
  %v2525 = vrcp.pop %v2461
  %v2526 = vrcp.pop %v2462
  %v2527 = vrcp.pop %v2463
  %v2528 = vrcp.pop %v2464
  %v2529 = vrcp.pop %v2465
  %v2530 = vrcp.pop %v2466
  %v2531 = vrcp.pop %v2467
  %v2532 = vrcp.pop %v2468
  %v2533 = vrcp.pop %v2469
  %v2534 = vrcp.pop %v2470
  %v2535 = vrcp.pop %v2471
  %v2536 = vrcp.pop %v2472
  %v2537 = vrcp.pop %v2473
  %v2538 = vrcp.pop %v2474
  %v2539 = vrcp.pop %v2475
  %v2540 = vrcp.pop %v2476
  %v2541 = vrcp.pop %v2477
  %v2542 = vrcp.pop %v2478
  %v2543 = vrcp.pop %v2479
  %v2544 = vrcp.pop %v2480
  %v2545 = vrcp.pop %v2481
  %v2546 = vrcp.pop %v2482
  %v2547 = vrcp.pop %v2483
  %v2548 = vrcp.pop %v2484
  %v2549 = vrcp.pop %v2485
  %v2550 = vrcp.pop %v2486
  %v2551 = vrcp.pop %v2487
  %v2552 = vrcp.pop %v2488
  %v2553 = vrcp.pop %v2489
  %v2554 = vrcp.pop %v2490
  %v2555 = vrcp.pop %v2491
  %v2556 = vrcp.pop %v2492
  %v2557 = vrcp.pop %v2493
  %v2558 = vrcp.pop %v2494
  %v2559 = vrcp.pop %v2495
  %v2560 = vrcp.pop %v2496
  %v2561 = vrcp.pop %v2497
  %v2562 = vrcp.pop %v2498
  %v2563 = vrcp.pop %v2499
  %v2564 = vrcp.pop %v2500
  %v2565 = vrcp.pop %v2501
  %v2566 = vrcp.pop %v2502
  %2631 = vrot.lane.b32.xlu0 %v2503, 120
  %v2632 = vpop.permute.xlu0 %2631
  %2633 = vrot.lane.b32.xlu0 %v2504, 120
  %v2634 = vpop.permute.xlu0 %2633
  %2635 = vrot.lane.b32.xlu0 %v2505, 120
  %v2636 = vpop.permute.xlu0 %2635
  %2637 = vrot.lane.b32.xlu0 %v2506, 120
  %v2638 = vpop.permute.xlu0 %2637
  %2639 = vrot.lane.b32.xlu0 %v2507, 120
  %v2640 = vpop.permute.xlu0 %2639
  %2641 = vrot.lane.b32.xlu0 %v2508, 120
  %v2642 = vpop.permute.xlu0 %2641
  %2643 = vrot.lane.b32.xlu0 %v2509, 120
  %v2644 = vpop.permute.xlu0 %2643
  %2645 = vrot.lane.b32.xlu0 %v2510, 120
  %v2646 = vpop.permute.xlu0 %2645
  %2647 = vrot.lane.b32.xlu0 %v2511, 120
  %v2648 = vpop.permute.xlu0 %2647
  %2649 = vrot.lane.b32.xlu0 %v2512, 120
  %v2650 = vpop.permute.xlu0 %2649
  %2651 = vrot.lane.b32.xlu0 %v2513, 120
  %v2652 = vpop.permute.xlu0 %2651
  %2653 = vrot.lane.b32.xlu0 %v2514, 120
  %v2654 = vpop.permute.xlu0 %2653
  %2655 = vrot.lane.b32.xlu0 %v2515, 120
  %v2656 = vpop.permute.xlu0 %2655
  %2657 = vrot.lane.b32.xlu0 %v2516, 120
  %v2658 = vpop.permute.xlu0 %2657
  %2659 = vrot.lane.b32.xlu0 %v2517, 120
  %v2660 = vpop.permute.xlu0 %2659
  %2661 = vrot.lane.b32.xlu0 %v2518, 120
  %v2662 = vpop.permute.xlu0 %2661
  %2663 = vrot.lane.b32.xlu0 %v2519, 120
  %v2664 = vpop.permute.xlu0 %2663
  %2665 = vrot.lane.b32.xlu0 %v2520, 120
  %v2666 = vpop.permute.xlu0 %2665
  %2667 = vrot.lane.b32.xlu0 %v2521, 120
  %v2668 = vpop.permute.xlu0 %2667
  %2669 = vrot.lane.b32.xlu0 %v2522, 120
  %v2670 = vpop.permute.xlu0 %2669
  %2671 = vrot.lane.b32.xlu0 %v2523, 120
  %v2672 = vpop.permute.xlu0 %2671
  %2673 = vrot.lane.b32.xlu0 %v2524, 120
  %v2674 = vpop.permute.xlu0 %2673
  %2675 = vrot.lane.b32.xlu0 %v2525, 120
  %v2676 = vpop.permute.xlu0 %2675
  %2677 = vrot.lane.b32.xlu0 %v2526, 120
  %v2678 = vpop.permute.xlu0 %2677
  %2679 = vrot.lane.b32.xlu0 %v2527, 120
  %v2680 = vpop.permute.xlu0 %2679
  %2681 = vrot.lane.b32.xlu0 %v2528, 120
  %v2682 = vpop.permute.xlu0 %2681
  %2683 = vrot.lane.b32.xlu0 %v2529, 120
  %v2684 = vpop.permute.xlu0 %2683
  %2685 = vrot.lane.b32.xlu0 %v2530, 120
  %v2686 = vpop.permute.xlu0 %2685
  %2687 = vrot.lane.b32.xlu0 %v2531, 120
  %v2688 = vpop.permute.xlu0 %2687
  %2689 = vrot.lane.b32.xlu0 %v2532, 120
  %v2690 = vpop.permute.xlu0 %2689
  %2691 = vrot.lane.b32.xlu0 %v2533, 120
  %v2692 = vpop.permute.xlu0 %2691
  %2693 = vrot.lane.b32.xlu0 %v2534, 120
  %v2694 = vpop.permute.xlu0 %2693
  %2695 = vrot.lane.b32.xlu0 %v2535, 120
  %v2696 = vpop.permute.xlu0 %2695
  %2697 = vrot.lane.b32.xlu0 %v2536, 120
  %v2698 = vpop.permute.xlu0 %2697
  %2699 = vrot.lane.b32.xlu0 %v2537, 120
  %v2700 = vpop.permute.xlu0 %2699
  %2701 = vrot.lane.b32.xlu0 %v2538, 120
  %v2702 = vpop.permute.xlu0 %2701
  %2703 = vrot.lane.b32.xlu0 %v2539, 120
  %v2704 = vpop.permute.xlu0 %2703
  %2705 = vrot.lane.b32.xlu0 %v2540, 120
  %v2706 = vpop.permute.xlu0 %2705
  %2707 = vrot.lane.b32.xlu0 %v2541, 120
  %v2708 = vpop.permute.xlu0 %2707
  %2709 = vrot.lane.b32.xlu0 %v2542, 120
  %v2710 = vpop.permute.xlu0 %2709
  %2711 = vrot.lane.b32.xlu0 %v2543, 120
  %v2712 = vpop.permute.xlu0 %2711
  %2713 = vrot.lane.b32.xlu0 %v2544, 120
  %v2714 = vpop.permute.xlu0 %2713
  %2715 = vrot.lane.b32.xlu0 %v2545, 120
  %v2716 = vpop.permute.xlu0 %2715
  %2717 = vrot.lane.b32.xlu0 %v2546, 120
  %v2718 = vpop.permute.xlu0 %2717
  %2719 = vrot.lane.b32.xlu0 %v2547, 120
  %v2720 = vpop.permute.xlu0 %2719
  %2721 = vrot.lane.b32.xlu0 %v2548, 120
  %v2722 = vpop.permute.xlu0 %2721
  %2723 = vrot.lane.b32.xlu0 %v2549, 120
  %v2724 = vpop.permute.xlu0 %2723
  %2725 = vrot.lane.b32.xlu0 %v2550, 120
  %v2726 = vpop.permute.xlu0 %2725
  %2727 = vrot.lane.b32.xlu0 %v2551, 120
  %v2728 = vpop.permute.xlu0 %2727
  %2729 = vrot.lane.b32.xlu0 %v2552, 120
  %v2730 = vpop.permute.xlu0 %2729
  %2731 = vrot.lane.b32.xlu0 %v2553, 120
  %v2732 = vpop.permute.xlu0 %2731
  %2733 = vrot.lane.b32.xlu0 %v2554, 120
  %v2734 = vpop.permute.xlu0 %2733
  %2735 = vrot.lane.b32.xlu0 %v2555, 120
  %v2736 = vpop.permute.xlu0 %2735
  %2737 = vrot.lane.b32.xlu0 %v2556, 120
  %v2738 = vpop.permute.xlu0 %2737
  %2739 = vrot.lane.b32.xlu0 %v2557, 120
  %v2740 = vpop.permute.xlu0 %2739
  %2741 = vrot.lane.b32.xlu0 %v2558, 120
  %v2742 = vpop.permute.xlu0 %2741
  %2743 = vrot.lane.b32.xlu0 %v2559, 120
  %v2744 = vpop.permute.xlu0 %2743
  %2745 = vrot.lane.b32.xlu0 %v2560, 120
  %v2746 = vpop.permute.xlu0 %2745
  %2747 = vrot.lane.b32.xlu0 %v2561, 120
  %v2748 = vpop.permute.xlu0 %2747
  %2749 = vrot.lane.b32.xlu0 %v2562, 120
  %v2750 = vpop.permute.xlu0 %2749
  %2751 = vrot.lane.b32.xlu0 %v2563, 120
  %v2752 = vpop.permute.xlu0 %2751
  %2753 = vrot.lane.b32.xlu0 %v2564, 120
  %v2754 = vpop.permute.xlu0 %2753
  %2755 = vrot.lane.b32.xlu0 %v2565, 120
  %v2756 = vpop.permute.xlu0 %2755
  %2757 = vrot.lane.b32.xlu0 %v2566, 120
  %v2758 = vpop.permute.xlu0 %2757
  %v2823 = vmul.f32 %v2088, %v2632
  %v2824 = vmul.f32 %v2090, %v2634
  %v2825 = vmul.f32 %v2093, %v2636
  %v2826 = vmul.f32 %v2095, %v2638
  %v2827 = vmul.f32 %v2098, %v2640
  %v2828 = vmul.f32 %v2100, %v2642
  %v2829 = vmul.f32 %v2103, %v2644
  %v2830 = vmul.f32 %v2105, %v2646
  %v2831 = vmul.f32 %v2108, %v2648
  %v2832 = vmul.f32 %v2110, %v2650
  %v2833 = vmul.f32 %v2113, %v2652
  %v2834 = vmul.f32 %v2115, %v2654
  %v2835 = vmul.f32 %v2118, %v2656
  %v2836 = vmul.f32 %v2120, %v2658
  %v2837 = vmul.f32 %v2123, %v2660
  %v2838 = vmul.f32 %v2125, %v2662
  %v2839 = vmul.f32 %v2128, %v2664
  %v2840 = vmul.f32 %v2130, %v2666
  %v2841 = vmul.f32 %v2133, %v2668
  %v2842 = vmul.f32 %v2135, %v2670
  %v2843 = vmul.f32 %v2138, %v2672
  %v2844 = vmul.f32 %v2140, %v2674
  %v2845 = vmul.f32 %v2143, %v2676
  %v2846 = vmul.f32 %v2145, %v2678
  %v2847 = vmul.f32 %v2148, %v2680
  %v2848 = vmul.f32 %v2150, %v2682
  %v2849 = vmul.f32 %v2153, %v2684
  %v2850 = vmul.f32 %v2155, %v2686
  %v2851 = vmul.f32 %v2158, %v2688
  %v2852 = vmul.f32 %v2160, %v2690
  %v2853 = vmul.f32 %v2163, %v2692
  %v2854 = vmul.f32 %v2165, %v2694
  %v2855 = vmul.f32 %v2168, %v2696
  %v2856 = vmul.f32 %v2170, %v2698
  %v2857 = vmul.f32 %v2173, %v2700
  %v2858 = vmul.f32 %v2175, %v2702
  %v2859 = vmul.f32 %v2178, %v2704
  %v2860 = vmul.f32 %v2180, %v2706
  %v2861 = vmul.f32 %v2183, %v2708
  %v2862 = vmul.f32 %v2185, %v2710
  %v2863 = vmul.f32 %v2188, %v2712
  %v2864 = vmul.f32 %v2190, %v2714
  %v2865 = vmul.f32 %v2193, %v2716
  %v2866 = vmul.f32 %v2195, %v2718
  %v2867 = vmul.f32 %v2198, %v2720
  %v2868 = vmul.f32 %v2200, %v2722
  %v2869 = vmul.f32 %v2203, %v2724
  %v2870 = vmul.f32 %v2205, %v2726
  %v2871 = vmul.f32 %v2208, %v2728
  %v2872 = vmul.f32 %v2210, %v2730
  %v2873 = vmul.f32 %v2213, %v2732
  %v2874 = vmul.f32 %v2215, %v2734
  %v2875 = vmul.f32 %v2218, %v2736
  %v2876 = vmul.f32 %v2220, %v2738
  %v2877 = vmul.f32 %v2223, %v2740
  %v2878 = vmul.f32 %v2225, %v2742
  %v2879 = vmul.f32 %v2228, %v2744
  %v2880 = vmul.f32 %v2230, %v2746
  %v2881 = vmul.f32 %v2233, %v2748
  %v2882 = vmul.f32 %v2235, %v2750
  %v2883 = vmul.f32 %v2238, %v2752
  %v2884 = vmul.f32 %v2240, %v2754
  %v2885 = vmul.f32 %v2243, %v2756
  %v2886 = vmul.f32 %v2245, %v2758
  %2887 = vst.msk [vmem:[%s3] sm:$0xff] %vm1530, %v2823
  %2888 = vst.msk [vmem:[%s3 + $0x8] sm:$0xff] %vm1530, %v2824
  %2889 = vst.msk [vmem:[%s3 + $0x10] sm:$0xff] %vm1530, %v2825
  %2890 = vst.msk [vmem:[%s3 + $0x18] sm:$0xff] %vm1530, %v2826
  %2891 = vst.msk [vmem:[%s3 + $0x20] sm:$0xff] %vm1530, %v2827
  %2892 = vst.msk [vmem:[%s3 + $0x28] sm:$0xff] %vm1530, %v2828
  %2893 = vst.msk [vmem:[%s3 + $0x30] sm:$0xff] %vm1530, %v2829
  %2894 = vst.msk [vmem:[%s3 + $0x38] sm:$0xff] %vm1530, %v2830
  %2895 = vst.msk [vmem:[%s3 + $0x40] sm:$0xff] %vm1530, %v2831
  %2896 = vst.msk [vmem:[%s3 + $0x48] sm:$0xff] %vm1530, %v2832
  %2897 = vst.msk [vmem:[%s3 + $0x50] sm:$0xff] %vm1530, %v2833
  %2898 = vst.msk [vmem:[%s3 + $0x58] sm:$0xff] %vm1530, %v2834
  %2899 = vst.msk [vmem:[%s3 + $0x60] sm:$0xff] %vm1530, %v2835
  %2900 = vst.msk [vmem:[%s3 + $0x68] sm:$0xff] %vm1530, %v2836
  %2901 = vst.msk [vmem:[%s3 + $0x70] sm:$0xff] %vm1530, %v2837
  %2902 = vst.msk [vmem:[%s3 + $0x78] sm:$0xff] %vm1530, %v2838
  %2903 = vst.msk [vmem:[%s3 + $0x80] sm:$0xff] %vm1530, %v2839
  %2904 = vst.msk [vmem:[%s3 + $0x88] sm:$0xff] %vm1530, %v2840
  %2905 = vst.msk [vmem:[%s3 + $0x90] sm:$0xff] %vm1530, %v2841
  %2906 = vst.msk [vmem:[%s3 + $0x98] sm:$0xff] %vm1530, %v2842
  %2907 = vst.msk [vmem:[%s3 + $0xa0] sm:$0xff] %vm1530, %v2843
  %2908 = vst.msk [vmem:[%s3 + $0xa8] sm:$0xff] %vm1530, %v2844
  %2909 = vst.msk [vmem:[%s3 + $0xb0] sm:$0xff] %vm1530, %v2845
  %2910 = vst.msk [vmem:[%s3 + $0xb8] sm:$0xff] %vm1530, %v2846
  %2911 = vst.msk [vmem:[%s3 + $0xc0] sm:$0xff] %vm1530, %v2847
  %2912 = vst.msk [vmem:[%s3 + $0xc8] sm:$0xff] %vm1530, %v2848
  %2913 = vst.msk [vmem:[%s3 + $0xd0] sm:$0xff] %vm1530, %v2849
  %2914 = vst.msk [vmem:[%s3 + $0xd8] sm:$0xff] %vm1530, %v2850
  %2915 = vst.msk [vmem:[%s3 + $0xe0] sm:$0xff] %vm1530, %v2851
  %2916 = vst.msk [vmem:[%s3 + $0xe8] sm:$0xff] %vm1530, %v2852
  %2917 = vst.msk [vmem:[%s3 + $0xf0] sm:$0xff] %vm1530, %v2853
  %2918 = vst.msk [vmem:[%s3 + $0xf8] sm:$0xff] %vm1530, %v2854
  %2919 = vst.msk [vmem:[%s3 + $0x100] sm:$0xff] %vm1530, %v2855
  %2920 = vst.msk [vmem:[%s3 + $0x108] sm:$0xff] %vm1530, %v2856
  %2921 = vst.msk [vmem:[%s3 + $0x110] sm:$0xff] %vm1530, %v2857
  %2922 = vst.msk [vmem:[%s3 + $0x118] sm:$0xff] %vm1530, %v2858
  %2923 = vst.msk [vmem:[%s3 + $0x120] sm:$0xff] %vm1530, %v2859
  %2924 = vst.msk [vmem:[%s3 + $0x128] sm:$0xff] %vm1530, %v2860
  %2925 = vst.msk [vmem:[%s3 + $0x130] sm:$0xff] %vm1530, %v2861
  %2926 = vst.msk [vmem:[%s3 + $0x138] sm:$0xff] %vm1530, %v2862
  %2927 = vst.msk [vmem:[%s3 + $0x140] sm:$0xff] %vm1530, %v2863
  %2928 = vst.msk [vmem:[%s3 + $0x148] sm:$0xff] %vm1530, %v2864
  %2929 = vst.msk [vmem:[%s3 + $0x150] sm:$0xff] %vm1530, %v2865
  %2930 = vst.msk [vmem:[%s3 + $0x158] sm:$0xff] %vm1530, %v2866
  %2931 = vst.msk [vmem:[%s3 + $0x160] sm:$0xff] %vm1530, %v2867
  %2932 = vst.msk [vmem:[%s3 + $0x168] sm:$0xff] %vm1530, %v2868
  %2933 = vst.msk [vmem:[%s3 + $0x170] sm:$0xff] %vm1530, %v2869
  %2934 = vst.msk [vmem:[%s3 + $0x178] sm:$0xff] %vm1530, %v2870
  %2935 = vst.msk [vmem:[%s3 + $0x180] sm:$0xff] %vm1530, %v2871
  %2936 = vst.msk [vmem:[%s3 + $0x188] sm:$0xff] %vm1530, %v2872
  %2937 = vst.msk [vmem:[%s3 + $0x190] sm:$0xff] %vm1530, %v2873
  %2938 = vst.msk [vmem:[%s3 + $0x198] sm:$0xff] %vm1530, %v2874
  %2939 = vst.msk [vmem:[%s3 + $0x1a0] sm:$0xff] %vm1530, %v2875
  %2940 = vst.msk [vmem:[%s3 + $0x1a8] sm:$0xff] %vm1530, %v2876
  %2941 = vst.msk [vmem:[%s3 + $0x1b0] sm:$0xff] %vm1530, %v2877
  %2942 = vst.msk [vmem:[%s3 + $0x1b8] sm:$0xff] %vm1530, %v2878
  %2943 = vst.msk [vmem:[%s3 + $0x1c0] sm:$0xff] %vm1530, %v2879
  %2944 = vst.msk [vmem:[%s3 + $0x1c8] sm:$0xff] %vm1530, %v2880
  %2945 = vst.msk [vmem:[%s3 + $0x1d0] sm:$0xff] %vm1530, %v2881
  %2946 = vst.msk [vmem:[%s3 + $0x1d8] sm:$0xff] %vm1530, %v2882
  %2947 = vst.msk [vmem:[%s3 + $0x1e0] sm:$0xff] %vm1530, %v2883
  %2948 = vst.msk [vmem:[%s3 + $0x1e8] sm:$0xff] %vm1530, %v2884
  %2949 = vst.msk [vmem:[%s3 + $0x1f0] sm:$0xff] %vm1530, %v2885
  %2950 = vst.msk [vmem:[%s3 + $0x1f8] sm:$0xff] %vm1530, %v2886
  // Predicated region
  $region14: #{tpu_custom_call.1} parent=0 // pred_check
    _
  $region15: #{tpu_custom_call.1} parent=0 // pred_check_branch
    %2952 = sbr.rel (0) target = $region17
  $region16: #{tpu_custom_call.1} parent=0 // pred_region
    _
  $region17: #{tpu_custom_call.1} parent=0 // pred_fallthru
    _
  // Predicated region
  $region18: #{tpu_custom_call.1} parent=0 // pred_check
    _
  $region19: #{tpu_custom_call.1} parent=0 // pred_check_branch
    %2954 = sbr.rel (0) target = $region21
  $region20: #{tpu_custom_call.1} parent=0 // pred_region
    _
  $region21: #{tpu_custom_call.1} parent=0 // pred_fallthru
    _

</llo_original>
